<compile_context>
chip_gen: v5e
topology: v5e:2x2
jax: 0.10.0
libtpu: 0.0.40
codegen_flags: <defaults>
</compile_context>

<pallas_src>
import functools

import jax
import jax.numpy as jnp
from jax.experimental import pallas as pl
from jax.experimental.pallas import tpu as pltpu  # noqa: F401  (TPU backend assumed)

# ----------------------------- config (small, synthetic) --------------------
TEXT_DIM = 32            # config.text_dim
HIDDEN_DIM = 32          # config.hidden_dim (swin token dim); == TEXT_DIM so concat works
CLS_HIDDEN = 64          # config.classifier_hidden_dim
NUM_CLASSES = 2          # config.num_classes
OUT_PAD = 128            # lane-dense padded classifier output width
LSTM_H = TEXT_DIM // 2   # hidden per direction (bidirectional -> 2*LSTM_H = TEXT_DIM)
VOCAB = 100
VOCAB_PAD = 128          # lane-padded vocab for the one-hot embedding matmul
SEQ_LEN = 8
BATCH = 2
B_PAD = 8                # batch padded to one full sublane group
IMG_C, IMG_H, IMG_W = 3, 16, 16
PATCH = 4
N_PATCH = (IMG_H // PATCH) * (IMG_W // PATCH)   # 16
PATCH_DIM = IMG_C * PATCH * PATCH               # 48
GATES = 4 * LSTM_H                              # 64


# ----------------------------- packed weight-slab layout ---------------------
def _slab_offsets():
    off, r = {}, 0

    def add(name, rows):
        nonlocal r
        off[name] = r
        r += rows

    add('emb', VOCAB_PAD)       # rows 0:128,  lanes 0:32   embedding table (zero padded)
    add('w0', TEXT_DIM)         # 32 rows,     lanes 0:128  layer-0 wih [fwd | bwd]
    add('w1_top', LSTM_H)       # 16 rows,     lanes 0:128  layer-1 wih rows acting on h_f0
    add('w1_bot', LSTM_H)       # 16 rows,     lanes 0:128  layer-1 wih rows acting on h_b0
    add('whh0_f', LSTM_H)       # 16 rows,     lanes 0:64
    add('whh0_b', LSTM_H)
    add('whh1_f', LSTM_H)
    add('w1q_f', LSTM_H)        # classifier w1 rows for h_f1_last
    add('w1q_b', LSTM_H)        # classifier w1 rows for h_b1_last
    add('wimg', PATCH_DIM)      # 48 rows, lanes 0:64  (swin_img/N_PATCH) @ w1_img  (folded)
    add('wela', PATCH_DIM)      # 48 rows, lanes 0:64  (swin_ela/N_PATCH) @ w1_ela  (folded)
    add('w2', CLS_HIDDEN)       # 64 rows, lanes 0:128 classifier second layer (lane padded)
    add('bias', 8)              # row+0: b0, +1: b1(lstm l1), +2: b1_fold(0:64), +3: b2
    return off, r


OFF, SLAB_ROWS = _slab_offsets()   # all offsets are multiples of 8


# ----------------------------- fused forward kernel --------------------------
def _sgke_fused_kernel(ids_ref, patches_ref, slab_ref, out_ref):
    L, B, H, G = SEQ_LEN, B_PAD, LSTM_H, GATES

    # ---- weights / biases: load once (hoisted out of all recurrences) ----
    emb   = slab_ref[OFF['emb']:OFF['emb'] + VOCAB_PAD, :TEXT_DIM]        # (128, 32)
    w0    = slab_ref[OFF['w0']:OFF['w0'] + TEXT_DIM, :]                   # (32, 128)
    w1t   = slab_ref[OFF['w1_top']:OFF['w1_top'] + H, :]                  # (16, 128)
    w1b   = slab_ref[OFF['w1_bot']:OFF['w1_bot'] + H, :]                  # (16, 128)
    whh0f = slab_ref[OFF['whh0_f']:OFF['whh0_f'] + H, :G]                 # (16, 64)
    whh0b = slab_ref[OFF['whh0_b']:OFF['whh0_b'] + H, :G]
    whh1f = slab_ref[OFF['whh1_f']:OFF['whh1_f'] + H, :G]
    w1qf  = slab_ref[OFF['w1q_f']:OFF['w1q_f'] + H, :CLS_HIDDEN]          # (16, 64)
    w1qb  = slab_ref[OFF['w1q_b']:OFF['w1q_b'] + H, :CLS_HIDDEN]
    wimg  = slab_ref[OFF['wimg']:OFF['wimg'] + PATCH_DIM, :CLS_HIDDEN]    # (48, 64)
    wela  = slab_ref[OFF['wela']:OFF['wela'] + PATCH_DIM, :CLS_HIDDEN]
    w2    = slab_ref[OFF['w2']:OFF['w2'] + CLS_HIDDEN, :]                 # (64, 128)
    b0    = slab_ref[OFF['bias'] + 0:OFF['bias'] + 1, :]                  # (1, 128)
    b1l   = slab_ref[OFF['bias'] + 1:OFF['bias'] + 2, :]                  # (1, 128)
    b1c   = slab_ref[OFF['bias'] + 2:OFF['bias'] + 3, :CLS_HIDDEN]        # (1, 64)
    b2    = slab_ref[OFF['bias'] + 3:OFF['bias'] + 4, :]                  # (1, 128)

    # ---- BERT stand-in: in-kernel embedding lookup via one-hot matmul (exact) ----
    ids = ids_ref[...]                                                    # (L*B, 1) int32
    iota = jax.lax.broadcasted_iota(jnp.int32, (L * B, VOCAB_PAD), 1)
    onehot = (ids == iota).astype(jnp.float32)                            # (64, 128)
    x2d = jnp.dot(onehot, emb, preferred_element_type=jnp.float32)        # (64, 32)

    # ---- Swin stand-ins (independent of the LSTM chain; 1/N_PATCH folded in) ----
    sums = jnp.sum(patches_ref[...], axis=1)                              # (16, 48)
    cls_base = (jnp.dot(sums[:B, :], wimg, preferred_element_type=jnp.float32)
                + jnp.dot(sums[B:, :], wela, preferred_element_type=jnp.float32)
                + b1c)                                                    # (8, 64)

    # ---- LSTM layer 0: one fused input projection for both directions ----
    gx0 = jnp.dot(x2d, w0, preferred_element_type=jnp.float32) + b0       # (64, 128)
    gxf0 = gx0[:, :G]                                                     # lane split once,
    gxb0 = gx0[:, G:]                                                     # outside recurrence

    def scan_dir(gx, whh, reverse, keep_all):
        """Unrolled LSTM over pre-projected gates gx: (L*B, 4H). Gate order (i,f,o,g)."""
        order = range(L - 1, -1, -1) if reverse else range(L)
        hs = [None] * L
        h = c = None
        for step, t in enumerate(order):
            gates = gx[t * B:(t + 1) * B, :]                              # (8, 64) aligned
            if step > 0:
                gates = gates + jnp.dot(h, whh, preferred_element_type=jnp.float32)
            s = jax.nn.sigmoid(gates[:, :3 * H])
            g = jnp.tanh(gates[:, 3 * H:])
            i_g, f_g, o_g = s[:, :H], s[:, H:2 * H], s[:, 2 * H:3 * H]
            c = i_g * g if step == 0 else f_g * c + i_g * g               # zero init state
            h = o_g * jnp.tanh(c)
            if keep_all:
                hs[t] = h
        return hs, h

    hs_f0, _ = scan_dir(gxf0, whh0f, reverse=False, keep_all=True)
    hs_b0, _ = scan_dir(gxb0, whh0b, reverse=True, keep_all=True)

    # ---- LSTM layer 1: row-split input projection (no (L*B, 2H) concat) ----
    hf0 = jnp.concatenate(hs_f0, axis=0)                                  # (64, 16) aligned
    hb0 = jnp.concatenate(hs_b0, axis=0)                                  # (64, 16) aligned
    g1 = (jnp.dot(hf0, w1t, preferred_element_type=jnp.float32)
          + jnp.dot(hb0, w1b, preferred_element_type=jnp.float32) + b1l)  # (64, 128)

    # forward direction: full scan, only the final hidden is consumed
    _, h_f1_last = scan_dir(g1[:, :G], whh1f, reverse=False, keep_all=False)

    # backward hidden at position L-1 == its first step (zero initial state)
    gb1 = g1[(L - 1) * B:L * B, G:]                                       # (8, 64)
    sb = jax.nn.sigmoid(gb1[:, :3 * H])
    gg = jnp.tanh(gb1[:, 3 * H:])
    h_b1_last = sb[:, 2 * H:3 * H] * jnp.tanh(sb[:, :H] * gg)             # (8, 16)

    # ---- classifier: w1 row-split sums (no feature concat) ----
    h1 = (cls_base
          + jnp.dot(h_f1_last, w1qf, preferred_element_type=jnp.float32)
          + jnp.dot(h_b1_last, w1qb, preferred_element_type=jnp.float32))  # (8, 64)
    h1 = jnp.where(h1 > 0.0, h1, 0.01 * h1)                               # LeakyReLU(0.01)
    # Lane-dense (8, 128) store; wrapper slices [:BATCH, :NUM_CLASSES].
    out_ref[...] = jnp.dot(h1, w2, preferred_element_type=jnp.float32) + b2


# ----------------------------- wrapper / glue ---------------------------------
def extract_patches(img):
    # img: (B, C, H, W) NCHW -> (B, N_patches, C*PATCH*PATCH)  [host glue]
    B, C, H, W = img.shape
    hp, wp = H // PATCH, W // PATCH
    p = img.reshape(B, C, hp, PATCH, wp, PATCH)
    p = p.transpose(0, 2, 4, 1, 3, 5)
    return p.reshape(B, hp * wp, C * PATCH * PATCH)


def sgke_sg_e_forward(packed, qcap_ids, qimg, ela_img):
    slab = packed['slab']

    # ids: batch-pad to a full sublane group, time-major layout (row = t*B_PAD + b)
    ids_pad = jnp.zeros((B_PAD, SEQ_LEN), jnp.int32).at[:BATCH].set(qcap_ids.astype(jnp.int32))
    ids_tm = ids_pad.T.reshape(SEQ_LEN * B_PAD, 1)

    def pad_img(x):
        z = jnp.zeros((B_PAD,) + x.shape[1:], jnp.float32)
        return z.at[:x.shape[0]].set(x.astype(jnp.float32))

    # both image streams packed into a single input: rows 0:8 = qImg, 8:16 = ELA
    patches = jnp.concatenate([extract_patches(pad_img(qimg)),
                               extract_patches(pad_img(ela_img))], axis=0)  # (16, 16, 48)

    out = pl.pallas_call(
        _sgke_fused_kernel,
        out_shape=jax.ShapeDtypeStruct((B_PAD, OUT_PAD), jnp.float32),
    )(ids_tm, patches, slab)
    return out[:BATCH, :NUM_CLASSES]


# ----------------------------- deterministic params --------------------------
def init_params(key):
    keys = jax.random.split(key, 20)

    def nrm(k, shape, scale=0.1):
        return (scale * jax.random.normal(k, shape)).astype(jnp.float32)

    params = {'bert_emb': nrm(keys[0], (VOCAB, TEXT_DIM), 0.02)}
    ki = 1
    for layer in (0, 1):
        d_in = TEXT_DIM  # layer 0: TEXT_DIM; layer 1: 2*LSTM_H == TEXT_DIM
        p = {}
        for d in ('f', 'b'):
            # Gate columns generated directly in (i, f, o, g) order; combined
            # bias = b_ih + b_hh folded into a single (1, 4H) row.
            p[f'wih_{d}'] = nrm(keys[ki], (d_in, GATES)); ki += 1
            p[f'whh_{d}'] = nrm(keys[ki], (LSTM_H, GATES)); ki += 1
            p[f'b_{d}'] = jnp.zeros((1, GATES), jnp.float32)
        params[f'lstm_l{layer}'] = p
    for name in ('swin_img', 'swin_ela'):
        params[name] = {'w': nrm(keys[ki], (PATCH_DIM, HIDDEN_DIM)),
                        'b': jnp.zeros((1, HIDDEN_DIM), jnp.float32)}
        ki += 1
    params['cls'] = {'w1': nrm(keys[ki], (3 * HIDDEN_DIM, CLS_HIDDEN)),
                     'b1': jnp.zeros((1, CLS_HIDDEN), jnp.float32),
                     'w2': nrm(keys[ki + 1], (CLS_HIDDEN, NUM_CLASSES)),
                     'b2': jnp.zeros((1, NUM_CLASSES), jnp.float32)}
    return params


def pack_params(params):
    """Fold + pack all weights into one (SLAB_ROWS, 128) f32 slab (one DMA)."""
    H = LSTM_H
    p0, p1 = params['lstm_l0'], params['lstm_l1']
    swi, swe, cls = params['swin_img'], params['swin_ela'], params['cls']
    w1 = cls['w1']                                        # (96, 64)
    w1_img = w1[2 * H:2 * H + HIDDEN_DIM]                 # rows acting on img feature
    w1_ela = w1[2 * H + HIDDEN_DIM:]                      # rows acting on ela feature

    slab = jnp.zeros((SLAB_ROWS, 128), jnp.float32)

    def put(name, val):
        nonlocal slab
        r0 = OFF[name]
        nr, nc = val.shape
        slab = slab.at[r0:r0 + nr, :nc].set(val)

    put('emb', params['bert_emb'])                                        # (100, 32)
    put('w0', jnp.concatenate([p0['wih_f'], p0['wih_b']], axis=1))        # (32, 128)
    put('w1_top', jnp.concatenate([p1['wih_f'][:H], p1['wih_b'][:H]], axis=1))
    put('w1_bot', jnp.concatenate([p1['wih_f'][H:], p1['wih_b'][H:]], axis=1))
    put('whh0_f', p0['whh_f'])
    put('whh0_b', p0['whh_b'])
    put('whh1_f', p1['whh_f'])
    put('w1q_f', w1[:H])
    put('w1q_b', w1[H:2 * H])
    # exact linear folding: (mean @ w_swin + b_swin) @ w1_x == sum @ ((w_swin/N) @ w1_x) + b_swin @ w1_x
    put('wimg', (swi['w'] / N_PATCH) @ w1_img)
    put('wela', (swe['w'] / N_PATCH) @ w1_ela)
    w2p = jnp.zeros((CLS_HIDDEN, OUT_PAD), jnp.float32).at[:, :NUM_CLASSES].set(cls['w2'])
    put('w2', w2p)

    b0 = jnp.concatenate([p0['b_f'], p0['b_b']], axis=1)                  # (1, 128)
    b1l = jnp.concatenate([p1['b_f'], p1['b_b']], axis=1)                 # (1, 128)
    b1c = cls['b1'] + swi['b'] @ w1_img + swe['b'] @ w1_ela               # (1, 64)
    b2 = jnp.zeros((1, OUT_PAD), jnp.float32).at[:, :NUM_CLASSES].set(cls['b2'])
    slab = slab.at[OFF['bias'] + 0, :].set(b0[0])
    slab = slab.at[OFF['bias'] + 1, :].set(b1l[0])
    slab = slab.at[OFF['bias'] + 2, :CLS_HIDDEN].set(b1c[0])
    slab = slab.at[OFF['bias'] + 3, :].set(b2[0])
    return {'slab': slab}


# ----------------------------- main -------------------------------------------
if __name__ == "__main__":
    key = jax.random.PRNGKey(0)
    pkey, k1, k2, k3 = jax.random.split(key, 4)
    params = init_params(pkey)
    packed = pack_params(params)

    qcap_ids = jax.random.randint(k1, (BATCH, SEQ_LEN), 0, VOCAB)            # qCap input_ids
    qimg = jax.random.normal(k2, (BATCH, IMG_C, IMG_H, IMG_W), jnp.float32)  # NCHW
    ela_img = jax.random.normal(k3, (BATCH, IMG_C, IMG_H, IMG_W), jnp.float32)

    fwd = jax.jit(functools.partial(sgke_sg_e_forward, packed))
    logits = fwd(qcap_ids, qimg, ela_img)
    jax.block_until_ready(logits)
    assert logits.shape == (BATCH, NUM_CLASSES) and logits.dtype == jnp.float32
    print("KERNEL_OK")
</pallas_src>

<mosaic_0001>
module attributes {stable_mosaic.version = 11 : i64} {
  func.func @_sgke_fused_kernel(%arg0: memref<64x1xi32, #tpu.memory_space<vmem>>, %arg1: memref<16x16x48xf32, #tpu.memory_space<vmem>>, %arg2: memref<440x128xf32, #tpu.memory_space<vmem>>, %arg3: memref<8x128xf32, #tpu.memory_space<vmem>>) attributes {dimension_semantics = [], scalar_prefetch = 0 : i64, scratch_operands = 0 : i64, tpu.core_type = #tpu.core_type<tc>} {
    %c0 = arith.constant 0 : index
    %c0_0 = arith.constant 0 : index
    %0 = vector.load %arg2[%c0, %c0_0] : memref<440x128xf32, #tpu.memory_space<vmem>>, vector<128x32xf32>
    %c128 = arith.constant 128 : index
    %c0_1 = arith.constant 0 : index
    %1 = vector.load %arg2[%c128, %c0_1] : memref<440x128xf32, #tpu.memory_space<vmem>>, vector<32x128xf32>
    %c160 = arith.constant 160 : index
    %c0_2 = arith.constant 0 : index
    %2 = vector.load %arg2[%c160, %c0_2] : memref<440x128xf32, #tpu.memory_space<vmem>>, vector<16x128xf32>
    %c176 = arith.constant 176 : index
    %c0_3 = arith.constant 0 : index
    %3 = vector.load %arg2[%c176, %c0_3] : memref<440x128xf32, #tpu.memory_space<vmem>>, vector<16x128xf32>
    %c192 = arith.constant 192 : index
    %c0_4 = arith.constant 0 : index
    %4 = vector.load %arg2[%c192, %c0_4] : memref<440x128xf32, #tpu.memory_space<vmem>>, vector<16x64xf32>
    %c208 = arith.constant 208 : index
    %c0_5 = arith.constant 0 : index
    %5 = vector.load %arg2[%c208, %c0_5] : memref<440x128xf32, #tpu.memory_space<vmem>>, vector<16x64xf32>
    %c224 = arith.constant 224 : index
    %c0_6 = arith.constant 0 : index
    %6 = vector.load %arg2[%c224, %c0_6] : memref<440x128xf32, #tpu.memory_space<vmem>>, vector<16x64xf32>
    %c240 = arith.constant 240 : index
    %c0_7 = arith.constant 0 : index
    %7 = vector.load %arg2[%c240, %c0_7] : memref<440x128xf32, #tpu.memory_space<vmem>>, vector<16x64xf32>
    %c256 = arith.constant 256 : index
    %c0_8 = arith.constant 0 : index
    %8 = vector.load %arg2[%c256, %c0_8] : memref<440x128xf32, #tpu.memory_space<vmem>>, vector<16x64xf32>
    %c272 = arith.constant 272 : index
    %c0_9 = arith.constant 0 : index
    %9 = vector.load %arg2[%c272, %c0_9] : memref<440x128xf32, #tpu.memory_space<vmem>>, vector<48x64xf32>
    %c320 = arith.constant 320 : index
    %c0_10 = arith.constant 0 : index
    %10 = vector.load %arg2[%c320, %c0_10] : memref<440x128xf32, #tpu.memory_space<vmem>>, vector<48x64xf32>
    %c368 = arith.constant 368 : index
    %c0_11 = arith.constant 0 : index
    %11 = vector.load %arg2[%c368, %c0_11] : memref<440x128xf32, #tpu.memory_space<vmem>>, vector<64x128xf32>
    %c432 = arith.constant 432 : index
    %c0_12 = arith.constant 0 : index
    %12 = vector.load %arg2[%c432, %c0_12] : memref<440x128xf32, #tpu.memory_space<vmem>>, vector<1x128xf32>
    %c433 = arith.constant 433 : index
    %c0_13 = arith.constant 0 : index
    %13 = vector.load %arg2[%c433, %c0_13] : memref<440x128xf32, #tpu.memory_space<vmem>>, vector<1x128xf32>
    %c434 = arith.constant 434 : index
    %c0_14 = arith.constant 0 : index
    %14 = vector.load %arg2[%c434, %c0_14] : memref<440x128xf32, #tpu.memory_space<vmem>>, vector<1x64xf32>
    %c435 = arith.constant 435 : index
    %c0_15 = arith.constant 0 : index
    %15 = vector.load %arg2[%c435, %c0_15] : memref<440x128xf32, #tpu.memory_space<vmem>>, vector<1x128xf32>
    %c0_16 = arith.constant 0 : index
    %c0_17 = arith.constant 0 : index
    %16 = vector.load %arg0[%c0_16, %c0_17] : memref<64x1xi32, #tpu.memory_space<vmem>>, vector<64x1xi32>
    %17 = tpu.iota {dimensions = array<i32: 1>} : vector<64x128xi32>
    %18 = vector.broadcast %16 : vector<64x1xi32> to vector<64x128xi32>
    %19 = arith.cmpi eq, %18, %17 : vector<64x128xi32>
    %20 = arith.extui %19 : vector<64x128xi1> to vector<64x128xi32>
    %21 = arith.sitofp %20 : vector<64x128xi32> to vector<64x128xf32>
    %cst = arith.constant dense<0.000000e+00> : vector<64x32xf32>
    %22 = tpu.matmul %21, %0, %cst {dimension_numbers = #tpu.dot_dimension_numbers<[1], [0], [0], [1], [0, 0, 1, 1], [], []>} : vector<64x128xf32>, vector<128x32xf32>, vector<64x32xf32> -> vector<64x32xf32>
    %c0_18 = arith.constant 0 : index
    %c0_19 = arith.constant 0 : index
    %c0_20 = arith.constant 0 : index
    %23 = vector.load %arg1[%c0_18, %c0_19, %c0_20] : memref<16x16x48xf32, #tpu.memory_space<vmem>>, vector<16x16x48xf32>
    %cst_21 = arith.constant dense<0.000000e+00> : vector<16x48xf32>
    %24 = vector.multi_reduction <add>, %23, %cst_21 [1] : vector<16x16x48xf32> to vector<16x48xf32>
    %25 = vector.extract_strided_slice %24 {offsets = [0, 0], sizes = [8, 48], strides = [1, 1]} : vector<16x48xf32> to vector<8x48xf32>
    %cst_22 = arith.constant dense<0.000000e+00> : vector<8x64xf32>
    %26 = tpu.matmul %25, %9, %cst_22 {dimension_numbers = #tpu.dot_dimension_numbers<[1], [0], [0], [1], [0, 0, 1, 1], [], []>} : vector<8x48xf32>, vector<48x64xf32>, vector<8x64xf32> -> vector<8x64xf32>
    %27 = vector.extract_strided_slice %24 {offsets = [8, 0], sizes = [8, 48], strides = [1, 1]} : vector<16x48xf32> to vector<8x48xf32>
    %cst_23 = arith.constant dense<0.000000e+00> : vector<8x64xf32>
    %28 = tpu.matmul %27, %10, %cst_23 {dimension_numbers = #tpu.dot_dimension_numbers<[1], [0], [0], [1], [0, 0, 1, 1], [], []>} : vector<8x48xf32>, vector<48x64xf32>, vector<8x64xf32> -> vector<8x64xf32>
    %29 = arith.addf %26, %28 : vector<8x64xf32>
    %30 = vector.broadcast %14 : vector<1x64xf32> to vector<8x64xf32>
    %31 = arith.addf %29, %30 : vector<8x64xf32>
    %cst_24 = arith.constant dense<0.000000e+00> : vector<64x128xf32>
    %32 = tpu.matmul %22, %1, %cst_24 {dimension_numbers = #tpu.dot_dimension_numbers<[1], [0], [0], [1], [0, 0, 1, 1], [], []>} : vector<64x32xf32>, vector<32x128xf32>, vector<64x128xf32> -> vector<64x128xf32>
    %33 = vector.broadcast %12 : vector<1x128xf32> to vector<64x128xf32>
    %34 = arith.addf %32, %33 : vector<64x128xf32>
    %35 = vector.extract_strided_slice %34 {offsets = [0, 0], sizes = [64, 64], strides = [1, 1]} : vector<64x128xf32> to vector<64x64xf32>
    %36 = vector.extract_strided_slice %34 {offsets = [0, 64], sizes = [64, 64], strides = [1, 1]} : vector<64x128xf32> to vector<64x64xf32>
    %37 = vector.extract_strided_slice %35 {offsets = [0, 0], sizes = [8, 64], strides = [1, 1]} : vector<64x64xf32> to vector<8x64xf32>
    %38 = vector.extract_strided_slice %37 {offsets = [0, 0], sizes = [8, 48], strides = [1, 1]} : vector<8x64xf32> to vector<8x48xf32>
    %39 = arith.negf %38 : vector<8x48xf32>
    %40 = math.exp %39 : vector<8x48xf32>
    %cst_25 = arith.constant 1.000000e+00 : f32
    %41 = vector.broadcast %cst_25 : f32 to vector<8x48xf32>
    %42 = arith.addf %41, %40 : vector<8x48xf32>
    %43 = arith.divf %41, %42 : vector<8x48xf32>
    %44 = vector.extract_strided_slice %37 {offsets = [0, 48], sizes = [8, 16], strides = [1, 1]} : vector<8x64xf32> to vector<8x16xf32>
    %45 = math.tanh %44 : vector<8x16xf32>
    %46 = vector.extract_strided_slice %43 {offsets = [0, 0], sizes = [8, 16], strides = [1, 1]} : vector<8x48xf32> to vector<8x16xf32>
    %47 = vector.extract_strided_slice %43 {offsets = [0, 32], sizes = [8, 16], strides = [1, 1]} : vector<8x48xf32> to vector<8x16xf32>
    %48 = arith.mulf %46, %45 : vector<8x16xf32>
    %49 = math.tanh %48 : vector<8x16xf32>
    %50 = arith.mulf %47, %49 : vector<8x16xf32>
    %51 = vector.extract_strided_slice %35 {offsets = [8, 0], sizes = [8, 64], strides = [1, 1]} : vector<64x64xf32> to vector<8x64xf32>
    %cst_26 = arith.constant dense<0.000000e+00> : vector<8x64xf32>
    %52 = tpu.matmul %50, %4, %cst_26 {dimension_numbers = #tpu.dot_dimension_numbers<[1], [0], [0], [1], [0, 0, 1, 1], [], []>} : vector<8x16xf32>, vector<16x64xf32>, vector<8x64xf32> -> vector<8x64xf32>
    %53 = arith.addf %51, %52 : vector<8x64xf32>
    %54 = vector.extract_strided_slice %53 {offsets = [0, 0], sizes = [8, 48], strides = [1, 1]} : vector<8x64xf32> to vector<8x48xf32>
    %55 = arith.negf %54 : vector<8x48xf32>
    %56 = math.exp %55 : vector<8x48xf32>
    %cst_27 = arith.constant 1.000000e+00 : f32
    %57 = vector.broadcast %cst_27 : f32 to vector<8x48xf32>
    %58 = arith.addf %57, %56 : vector<8x48xf32>
    %59 = arith.divf %57, %58 : vector<8x48xf32>
    %60 = vector.extract_strided_slice %53 {offsets = [0, 48], sizes = [8, 16], strides = [1, 1]} : vector<8x64xf32> to vector<8x16xf32>
    %61 = math.tanh %60 : vector<8x16xf32>
    %62 = vector.extract_strided_slice %59 {offsets = [0, 0], sizes = [8, 16], strides = [1, 1]} : vector<8x48xf32> to vector<8x16xf32>
    %63 = vector.extract_strided_slice %59 {offsets = [0, 16], sizes = [8, 16], strides = [1, 1]} : vector<8x48xf32> to vector<8x16xf32>
    %64 = vector.extract_strided_slice %59 {offsets = [0, 32], sizes = [8, 16], strides = [1, 1]} : vector<8x48xf32> to vector<8x16xf32>
    %65 = arith.mulf %63, %48 : vector<8x16xf32>
    %66 = arith.mulf %62, %61 : vector<8x16xf32>
    %67 = arith.addf %65, %66 : vector<8x16xf32>
    %68 = math.tanh %67 : vector<8x16xf32>
    %69 = arith.mulf %64, %68 : vector<8x16xf32>
    %70 = vector.extract_strided_slice %35 {offsets = [16, 0], sizes = [8, 64], strides = [1, 1]} : vector<64x64xf32> to vector<8x64xf32>
    %cst_28 = arith.constant dense<0.000000e+00> : vector<8x64xf32>
    %71 = tpu.matmul %69, %4, %cst_28 {dimension_numbers = #tpu.dot_dimension_numbers<[1], [0], [0], [1], [0, 0, 1, 1], [], []>} : vector<8x16xf32>, vector<16x64xf32>, vector<8x64xf32> -> vector<8x64xf32>
    %72 = arith.addf %70, %71 : vector<8x64xf32>
    %73 = vector.extract_strided_slice %72 {offsets = [0, 0], sizes = [8, 48], strides = [1, 1]} : vector<8x64xf32> to vector<8x48xf32>
    %74 = arith.negf %73 : vector<8x48xf32>
    %75 = math.exp %74 : vector<8x48xf32>
    %cst_29 = arith.constant 1.000000e+00 : f32
    %76 = vector.broadcast %cst_29 : f32 to vector<8x48xf32>
    %77 = arith.addf %76, %75 : vector<8x48xf32>
    %78 = arith.divf %76, %77 : vector<8x48xf32>
    %79 = vector.extract_strided_slice %72 {offsets = [0, 48], sizes = [8, 16], strides = [1, 1]} : vector<8x64xf32> to vector<8x16xf32>
    %80 = math.tanh %79 : vector<8x16xf32>
    %81 = vector.extract_strided_slice %78 {offsets = [0, 0], sizes = [8, 16], strides = [1, 1]} : vector<8x48xf32> to vector<8x16xf32>
    %82 = vector.extract_strided_slice %78 {offsets = [0, 16], sizes = [8, 16], strides = [1, 1]} : vector<8x48xf32> to vector<8x16xf32>
    %83 = vector.extract_strided_slice %78 {offsets = [0, 32], sizes = [8, 16], strides = [1, 1]} : vector<8x48xf32> to vector<8x16xf32>
    %84 = arith.mulf %82, %67 : vector<8x16xf32>
    %85 = arith.mulf %81, %80 : vector<8x16xf32>
    %86 = arith.addf %84, %85 : vector<8x16xf32>
    %87 = math.tanh %86 : vector<8x16xf32>
    %88 = arith.mulf %83, %87 : vector<8x16xf32>
    %89 = vector.extract_strided_slice %35 {offsets = [24, 0], sizes = [8, 64], strides = [1, 1]} : vector<64x64xf32> to vector<8x64xf32>
    %cst_30 = arith.constant dense<0.000000e+00> : vector<8x64xf32>
    %90 = tpu.matmul %88, %4, %cst_30 {dimension_numbers = #tpu.dot_dimension_numbers<[1], [0], [0], [1], [0, 0, 1, 1], [], []>} : vector<8x16xf32>, vector<16x64xf32>, vector<8x64xf32> -> vector<8x64xf32>
    %91 = arith.addf %89, %90 : vector<8x64xf32>
    %92 = vector.extract_strided_slice %91 {offsets = [0, 0], sizes = [8, 48], strides = [1, 1]} : vector<8x64xf32> to vector<8x48xf32>
    %93 = arith.negf %92 : vector<8x48xf32>
    %94 = math.exp %93 : vector<8x48xf32>
    %cst_31 = arith.constant 1.000000e+00 : f32
    %95 = vector.broadcast %cst_31 : f32 to vector<8x48xf32>
    %96 = arith.addf %95, %94 : vector<8x48xf32>
    %97 = arith.divf %95, %96 : vector<8x48xf32>
    %98 = vector.extract_strided_slice %91 {offsets = [0, 48], sizes = [8, 16], strides = [1, 1]} : vector<8x64xf32> to vector<8x16xf32>
    %99 = math.tanh %98 : vector<8x16xf32>
    %100 = vector.extract_strided_slice %97 {offsets = [0, 0], sizes = [8, 16], strides = [1, 1]} : vector<8x48xf32> to vector<8x16xf32>
    %101 = vector.extract_strided_slice %97 {offsets = [0, 16], sizes = [8, 16], strides = [1, 1]} : vector<8x48xf32> to vector<8x16xf32>
    %102 = vector.extract_strided_slice %97 {offsets = [0, 32], sizes = [8, 16], strides = [1, 1]} : vector<8x48xf32> to vector<8x16xf32>
    %103 = arith.mulf %101, %86 : vector<8x16xf32>
    %104 = arith.mulf %100, %99 : vector<8x16xf32>
    %105 = arith.addf %103, %104 : vector<8x16xf32>
    %106 = math.tanh %105 : vector<8x16xf32>
    %107 = arith.mulf %102, %106 : vector<8x16xf32>
    %108 = vector.extract_strided_slice %35 {offsets = [32, 0], sizes = [8, 64], strides = [1, 1]} : vector<64x64xf32> to vector<8x64xf32>
    %cst_32 = arith.constant dense<0.000000e+00> : vector<8x64xf32>
    %109 = tpu.matmul %107, %4, %cst_32 {dimension_numbers = #tpu.dot_dimension_numbers<[1], [0], [0], [1], [0, 0, 1, 1], [], []>} : vector<8x16xf32>, vector<16x64xf32>, vector<8x64xf32> -> vector<8x64xf32>
    %110 = arith.addf %108, %109 : vector<8x64xf32>
    %111 = vector.extract_strided_slice %110 {offsets = [0, 0], sizes = [8, 48], strides = [1, 1]} : vector<8x64xf32> to vector<8x48xf32>
    %112 = arith.negf %111 : vector<8x48xf32>
    %113 = math.exp %112 : vector<8x48xf32>
    %cst_33 = arith.constant 1.000000e+00 : f32
    %114 = vector.broadcast %cst_33 : f32 to vector<8x48xf32>
    %115 = arith.addf %114, %113 : vector<8x48xf32>
    %116 = arith.divf %114, %115 : vector<8x48xf32>
    %117 = vector.extract_strided_slice %110 {offsets = [0, 48], sizes = [8, 16], strides = [1, 1]} : vector<8x64xf32> to vector<8x16xf32>
    %118 = math.tanh %117 : vector<8x16xf32>
    %119 = vector.extract_strided_slice %116 {offsets = [0, 0], sizes = [8, 16], strides = [1, 1]} : vector<8x48xf32> to vector<8x16xf32>
    %120 = vector.extract_strided_slice %116 {offsets = [0, 16], sizes = [8, 16], strides = [1, 1]} : vector<8x48xf32> to vector<8x16xf32>
    %121 = vector.extract_strided_slice %116 {offsets = [0, 32], sizes = [8, 16], strides = [1, 1]} : vector<8x48xf32> to vector<8x16xf32>
    %122 = arith.mulf %120, %105 : vector<8x16xf32>
    %123 = arith.mulf %119, %118 : vector<8x16xf32>
    %124 = arith.addf %122, %123 : vector<8x16xf32>
    %125 = math.tanh %124 : vector<8x16xf32>
    %126 = arith.mulf %121, %125 : vector<8x16xf32>
    %127 = vector.extract_strided_slice %35 {offsets = [40, 0], sizes = [8, 64], strides = [1, 1]} : vector<64x64xf32> to vector<8x64xf32>
    %cst_34 = arith.constant dense<0.000000e+00> : vector<8x64xf32>
    %128 = tpu.matmul %126, %4, %cst_34 {dimension_numbers = #tpu.dot_dimension_numbers<[1], [0], [0], [1], [0, 0, 1, 1], [], []>} : vector<8x16xf32>, vector<16x64xf32>, vector<8x64xf32> -> vector<8x64xf32>
    %129 = arith.addf %127, %128 : vector<8x64xf32>
    %130 = vector.extract_strided_slice %129 {offsets = [0, 0], sizes = [8, 48], strides = [1, 1]} : vector<8x64xf32> to vector<8x48xf32>
    %131 = arith.negf %130 : vector<8x48xf32>
    %132 = math.exp %131 : vector<8x48xf32>
    %cst_35 = arith.constant 1.000000e+00 : f32
    %133 = vector.broadcast %cst_35 : f32 to vector<8x48xf32>
    %134 = arith.addf %133, %132 : vector<8x48xf32>
    %135 = arith.divf %133, %134 : vector<8x48xf32>
    %136 = vector.extract_strided_slice %129 {offsets = [0, 48], sizes = [8, 16], strides = [1, 1]} : vector<8x64xf32> to vector<8x16xf32>
    %137 = math.tanh %136 : vector<8x16xf32>
    %138 = vector.extract_strided_slice %135 {offsets = [0, 0], sizes = [8, 16], strides = [1, 1]} : vector<8x48xf32> to vector<8x16xf32>
    %139 = vector.extract_strided_slice %135 {offsets = [0, 16], sizes = [8, 16], strides = [1, 1]} : vector<8x48xf32> to vector<8x16xf32>
    %140 = vector.extract_strided_slice %135 {offsets = [0, 32], sizes = [8, 16], strides = [1, 1]} : vector<8x48xf32> to vector<8x16xf32>
    %141 = arith.mulf %139, %124 : vector<8x16xf32>
    %142 = arith.mulf %138, %137 : vector<8x16xf32>
    %143 = arith.addf %141, %142 : vector<8x16xf32>
    %144 = math.tanh %143 : vector<8x16xf32>
    %145 = arith.mulf %140, %144 : vector<8x16xf32>
    %146 = vector.extract_strided_slice %35 {offsets = [48, 0], sizes = [8, 64], strides = [1, 1]} : vector<64x64xf32> to vector<8x64xf32>
    %cst_36 = arith.constant dense<0.000000e+00> : vector<8x64xf32>
    %147 = tpu.matmul %145, %4, %cst_36 {dimension_numbers = #tpu.dot_dimension_numbers<[1], [0], [0], [1], [0, 0, 1, 1], [], []>} : vector<8x16xf32>, vector<16x64xf32>, vector<8x64xf32> -> vector<8x64xf32>
    %148 = arith.addf %146, %147 : vector<8x64xf32>
    %149 = vector.extract_strided_slice %148 {offsets = [0, 0], sizes = [8, 48], strides = [1, 1]} : vector<8x64xf32> to vector<8x48xf32>
    %150 = arith.negf %149 : vector<8x48xf32>
    %151 = math.exp %150 : vector<8x48xf32>
    %cst_37 = arith.constant 1.000000e+00 : f32
    %152 = vector.broadcast %cst_37 : f32 to vector<8x48xf32>
    %153 = arith.addf %152, %151 : vector<8x48xf32>
    %154 = arith.divf %152, %153 : vector<8x48xf32>
    %155 = vector.extract_strided_slice %148 {offsets = [0, 48], sizes = [8, 16], strides = [1, 1]} : vector<8x64xf32> to vector<8x16xf32>
    %156 = math.tanh %155 : vector<8x16xf32>
    %157 = vector.extract_strided_slice %154 {offsets = [0, 0], sizes = [8, 16], strides = [1, 1]} : vector<8x48xf32> to vector<8x16xf32>
    %158 = vector.extract_strided_slice %154 {offsets = [0, 16], sizes = [8, 16], strides = [1, 1]} : vector<8x48xf32> to vector<8x16xf32>
    %159 = vector.extract_strided_slice %154 {offsets = [0, 32], sizes = [8, 16], strides = [1, 1]} : vector<8x48xf32> to vector<8x16xf32>
    %160 = arith.mulf %158, %143 : vector<8x16xf32>
    %161 = arith.mulf %157, %156 : vector<8x16xf32>
    %162 = arith.addf %160, %161 : vector<8x16xf32>
    %163 = math.tanh %162 : vector<8x16xf32>
    %164 = arith.mulf %159, %163 : vector<8x16xf32>
    %165 = vector.extract_strided_slice %35 {offsets = [56, 0], sizes = [8, 64], strides = [1, 1]} : vector<64x64xf32> to vector<8x64xf32>
    %cst_38 = arith.constant dense<0.000000e+00> : vector<8x64xf32>
    %166 = tpu.matmul %164, %4, %cst_38 {dimension_numbers = #tpu.dot_dimension_numbers<[1], [0], [0], [1], [0, 0, 1, 1], [], []>} : vector<8x16xf32>, vector<16x64xf32>, vector<8x64xf32> -> vector<8x64xf32>
    %167 = arith.addf %165, %166 : vector<8x64xf32>
    %168 = vector.extract_strided_slice %167 {offsets = [0, 0], sizes = [8, 48], strides = [1, 1]} : vector<8x64xf32> to vector<8x48xf32>
    %169 = arith.negf %168 : vector<8x48xf32>
    %170 = math.exp %169 : vector<8x48xf32>
    %cst_39 = arith.constant 1.000000e+00 : f32
    %171 = vector.broadcast %cst_39 : f32 to vector<8x48xf32>
    %172 = arith.addf %171, %170 : vector<8x48xf32>
    %173 = arith.divf %171, %172 : vector<8x48xf32>
    %174 = vector.extract_strided_slice %167 {offsets = [0, 48], sizes = [8, 16], strides = [1, 1]} : vector<8x64xf32> to vector<8x16xf32>
    %175 = math.tanh %174 : vector<8x16xf32>
    %176 = vector.extract_strided_slice %173 {offsets = [0, 0], sizes = [8, 16], strides = [1, 1]} : vector<8x48xf32> to vector<8x16xf32>
    %177 = vector.extract_strided_slice %173 {offsets = [0, 16], sizes = [8, 16], strides = [1, 1]} : vector<8x48xf32> to vector<8x16xf32>
    %178 = vector.extract_strided_slice %173 {offsets = [0, 32], sizes = [8, 16], strides = [1, 1]} : vector<8x48xf32> to vector<8x16xf32>
    %179 = arith.mulf %177, %162 : vector<8x16xf32>
    %180 = arith.mulf %176, %175 : vector<8x16xf32>
    %181 = arith.addf %179, %180 : vector<8x16xf32>
    %182 = math.tanh %181 : vector<8x16xf32>
    %183 = arith.mulf %178, %182 : vector<8x16xf32>
    %184 = vector.extract_strided_slice %36 {offsets = [56, 0], sizes = [8, 64], strides = [1, 1]} : vector<64x64xf32> to vector<8x64xf32>
    %185 = vector.extract_strided_slice %184 {offsets = [0, 0], sizes = [8, 48], strides = [1, 1]} : vector<8x64xf32> to vector<8x48xf32>
    %186 = arith.negf %185 : vector<8x48xf32>
    %187 = math.exp %186 : vector<8x48xf32>
    %cst_40 = arith.constant 1.000000e+00 : f32
    %188 = vector.broadcast %cst_40 : f32 to vector<8x48xf32>
    %189 = arith.addf %188, %187 : vector<8x48xf32>
    %190 = arith.divf %188, %189 : vector<8x48xf32>
    %191 = vector.extract_strided_slice %184 {offsets = [0, 48], sizes = [8, 16], strides = [1, 1]} : vector<8x64xf32> to vector<8x16xf32>
    %192 = math.tanh %191 : vector<8x16xf32>
    %193 = vector.extract_strided_slice %190 {offsets = [0, 0], sizes = [8, 16], strides = [1, 1]} : vector<8x48xf32> to vector<8x16xf32>
    %194 = vector.extract_strided_slice %190 {offsets = [0, 32], sizes = [8, 16], strides = [1, 1]} : vector<8x48xf32> to vector<8x16xf32>
    %195 = arith.mulf %193, %192 : vector<8x16xf32>
    %196 = math.tanh %195 : vector<8x16xf32>
    %197 = arith.mulf %194, %196 : vector<8x16xf32>
    %198 = vector.extract_strided_slice %36 {offsets = [48, 0], sizes = [8, 64], strides = [1, 1]} : vector<64x64xf32> to vector<8x64xf32>
    %cst_41 = arith.constant dense<0.000000e+00> : vector<8x64xf32>
    %199 = tpu.matmul %197, %5, %cst_41 {dimension_numbers = #tpu.dot_dimension_numbers<[1], [0], [0], [1], [0, 0, 1, 1], [], []>} : vector<8x16xf32>, vector<16x64xf32>, vector<8x64xf32> -> vector<8x64xf32>
    %200 = arith.addf %198, %199 : vector<8x64xf32>
    %201 = vector.extract_strided_slice %200 {offsets = [0, 0], sizes = [8, 48], strides = [1, 1]} : vector<8x64xf32> to vector<8x48xf32>
    %202 = arith.negf %201 : vector<8x48xf32>
    %203 = math.exp %202 : vector<8x48xf32>
    %cst_42 = arith.constant 1.000000e+00 : f32
    %204 = vector.broadcast %cst_42 : f32 to vector<8x48xf32>
    %205 = arith.addf %204, %203 : vector<8x48xf32>
    %206 = arith.divf %204, %205 : vector<8x48xf32>
    %207 = vector.extract_strided_slice %200 {offsets = [0, 48], sizes = [8, 16], strides = [1, 1]} : vector<8x64xf32> to vector<8x16xf32>
    %208 = math.tanh %207 : vector<8x16xf32>
    %209 = vector.extract_strided_slice %206 {offsets = [0, 0], sizes = [8, 16], strides = [1, 1]} : vector<8x48xf32> to vector<8x16xf32>
    %210 = vector.extract_strided_slice %206 {offsets = [0, 16], sizes = [8, 16], strides = [1, 1]} : vector<8x48xf32> to vector<8x16xf32>
    %211 = vector.extract_strided_slice %206 {offsets = [0, 32], sizes = [8, 16], strides = [1, 1]} : vector<8x48xf32> to vector<8x16xf32>
    %212 = arith.mulf %210, %195 : vector<8x16xf32>
    %213 = arith.mulf %209, %208 : vector<8x16xf32>
    %214 = arith.addf %212, %213 : vector<8x16xf32>
    %215 = math.tanh %214 : vector<8x16xf32>
    %216 = arith.mulf %211, %215 : vector<8x16xf32>
    %217 = vector.extract_strided_slice %36 {offsets = [40, 0], sizes = [8, 64], strides = [1, 1]} : vector<64x64xf32> to vector<8x64xf32>
    %cst_43 = arith.constant dense<0.000000e+00> : vector<8x64xf32>
    %218 = tpu.matmul %216, %5, %cst_43 {dimension_numbers = #tpu.dot_dimension_numbers<[1], [0], [0], [1], [0, 0, 1, 1], [], []>} : vector<8x16xf32>, vector<16x64xf32>, vector<8x64xf32> -> vector<8x64xf32>
    %219 = arith.addf %217, %218 : vector<8x64xf32>
    %220 = vector.extract_strided_slice %219 {offsets = [0, 0], sizes = [8, 48], strides = [1, 1]} : vector<8x64xf32> to vector<8x48xf32>
    %221 = arith.negf %220 : vector<8x48xf32>
    %222 = math.exp %221 : vector<8x48xf32>
    %cst_44 = arith.constant 1.000000e+00 : f32
    %223 = vector.broadcast %cst_44 : f32 to vector<8x48xf32>
    %224 = arith.addf %223, %222 : vector<8x48xf32>
    %225 = arith.divf %223, %224 : vector<8x48xf32>
    %226 = vector.extract_strided_slice %219 {offsets = [0, 48], sizes = [8, 16], strides = [1, 1]} : vector<8x64xf32> to vector<8x16xf32>
    %227 = math.tanh %226 : vector<8x16xf32>
    %228 = vector.extract_strided_slice %225 {offsets = [0, 0], sizes = [8, 16], strides = [1, 1]} : vector<8x48xf32> to vector<8x16xf32>
    %229 = vector.extract_strided_slice %225 {offsets = [0, 16], sizes = [8, 16], strides = [1, 1]} : vector<8x48xf32> to vector<8x16xf32>
    %230 = vector.extract_strided_slice %225 {offsets = [0, 32], sizes = [8, 16], strides = [1, 1]} : vector<8x48xf32> to vector<8x16xf32>
    %231 = arith.mulf %229, %214 : vector<8x16xf32>
    %232 = arith.mulf %228, %227 : vector<8x16xf32>
    %233 = arith.addf %231, %232 : vector<8x16xf32>
    %234 = math.tanh %233 : vector<8x16xf32>
    %235 = arith.mulf %230, %234 : vector<8x16xf32>
    %236 = vector.extract_strided_slice %36 {offsets = [32, 0], sizes = [8, 64], strides = [1, 1]} : vector<64x64xf32> to vector<8x64xf32>
    %cst_45 = arith.constant dense<0.000000e+00> : vector<8x64xf32>
    %237 = tpu.matmul %235, %5, %cst_45 {dimension_numbers = #tpu.dot_dimension_numbers<[1], [0], [0], [1], [0, 0, 1, 1], [], []>} : vector<8x16xf32>, vector<16x64xf32>, vector<8x64xf32> -> vector<8x64xf32>
    %238 = arith.addf %236, %237 : vector<8x64xf32>
    %239 = vector.extract_strided_slice %238 {offsets = [0, 0], sizes = [8, 48], strides = [1, 1]} : vector<8x64xf32> to vector<8x48xf32>
    %240 = arith.negf %239 : vector<8x48xf32>
    %241 = math.exp %240 : vector<8x48xf32>
    %cst_46 = arith.constant 1.000000e+00 : f32
    %242 = vector.broadcast %cst_46 : f32 to vector<8x48xf32>
    %243 = arith.addf %242, %241 : vector<8x48xf32>
    %244 = arith.divf %242, %243 : vector<8x48xf32>
    %245 = vector.extract_strided_slice %238 {offsets = [0, 48], sizes = [8, 16], strides = [1, 1]} : vector<8x64xf32> to vector<8x16xf32>
    %246 = math.tanh %245 : vector<8x16xf32>
    %247 = vector.extract_strided_slice %244 {offsets = [0, 0], sizes = [8, 16], strides = [1, 1]} : vector<8x48xf32> to vector<8x16xf32>
    %248 = vector.extract_strided_slice %244 {offsets = [0, 16], sizes = [8, 16], strides = [1, 1]} : vector<8x48xf32> to vector<8x16xf32>
    %249 = vector.extract_strided_slice %244 {offsets = [0, 32], sizes = [8, 16], strides = [1, 1]} : vector<8x48xf32> to vector<8x16xf32>
    %250 = arith.mulf %248, %233 : vector<8x16xf32>
    %251 = arith.mulf %247, %246 : vector<8x16xf32>
    %252 = arith.addf %250, %251 : vector<8x16xf32>
    %253 = math.tanh %252 : vector<8x16xf32>
    %254 = arith.mulf %249, %253 : vector<8x16xf32>
    %255 = vector.extract_strided_slice %36 {offsets = [24, 0], sizes = [8, 64], strides = [1, 1]} : vector<64x64xf32> to vector<8x64xf32>
    %cst_47 = arith.constant dense<0.000000e+00> : vector<8x64xf32>
    %256 = tpu.matmul %254, %5, %cst_47 {dimension_numbers = #tpu.dot_dimension_numbers<[1], [0], [0], [1], [0, 0, 1, 1], [], []>} : vector<8x16xf32>, vector<16x64xf32>, vector<8x64xf32> -> vector<8x64xf32>
    %257 = arith.addf %255, %256 : vector<8x64xf32>
    %258 = vector.extract_strided_slice %257 {offsets = [0, 0], sizes = [8, 48], strides = [1, 1]} : vector<8x64xf32> to vector<8x48xf32>
    %259 = arith.negf %258 : vector<8x48xf32>
    %260 = math.exp %259 : vector<8x48xf32>
    %cst_48 = arith.constant 1.000000e+00 : f32
    %261 = vector.broadcast %cst_48 : f32 to vector<8x48xf32>
    %262 = arith.addf %261, %260 : vector<8x48xf32>
    %263 = arith.divf %261, %262 : vector<8x48xf32>
    %264 = vector.extract_strided_slice %257 {offsets = [0, 48], sizes = [8, 16], strides = [1, 1]} : vector<8x64xf32> to vector<8x16xf32>
    %265 = math.tanh %264 : vector<8x16xf32>
    %266 = vector.extract_strided_slice %263 {offsets = [0, 0], sizes = [8, 16], strides = [1, 1]} : vector<8x48xf32> to vector<8x16xf32>
    %267 = vector.extract_strided_slice %263 {offsets = [0, 16], sizes = [8, 16], strides = [1, 1]} : vector<8x48xf32> to vector<8x16xf32>
    %268 = vector.extract_strided_slice %263 {offsets = [0, 32], sizes = [8, 16], strides = [1, 1]} : vector<8x48xf32> to vector<8x16xf32>
    %269 = arith.mulf %267, %252 : vector<8x16xf32>
    %270 = arith.mulf %266, %265 : vector<8x16xf32>
    %271 = arith.addf %269, %270 : vector<8x16xf32>
    %272 = math.tanh %271 : vector<8x16xf32>
    %273 = arith.mulf %268, %272 : vector<8x16xf32>
    %274 = vector.extract_strided_slice %36 {offsets = [16, 0], sizes = [8, 64], strides = [1, 1]} : vector<64x64xf32> to vector<8x64xf32>
    %cst_49 = arith.constant dense<0.000000e+00> : vector<8x64xf32>
    %275 = tpu.matmul %273, %5, %cst_49 {dimension_numbers = #tpu.dot_dimension_numbers<[1], [0], [0], [1], [0, 0, 1, 1], [], []>} : vector<8x16xf32>, vector<16x64xf32>, vector<8x64xf32> -> vector<8x64xf32>
    %276 = arith.addf %274, %275 : vector<8x64xf32>
    %277 = vector.extract_strided_slice %276 {offsets = [0, 0], sizes = [8, 48], strides = [1, 1]} : vector<8x64xf32> to vector<8x48xf32>
    %278 = arith.negf %277 : vector<8x48xf32>
    %279 = math.exp %278 : vector<8x48xf32>
    %cst_50 = arith.constant 1.000000e+00 : f32
    %280 = vector.broadcast %cst_50 : f32 to vector<8x48xf32>
    %281 = arith.addf %280, %279 : vector<8x48xf32>
    %282 = arith.divf %280, %281 : vector<8x48xf32>
    %283 = vector.extract_strided_slice %276 {offsets = [0, 48], sizes = [8, 16], strides = [1, 1]} : vector<8x64xf32> to vector<8x16xf32>
    %284 = math.tanh %283 : vector<8x16xf32>
    %285 = vector.extract_strided_slice %282 {offsets = [0, 0], sizes = [8, 16], strides = [1, 1]} : vector<8x48xf32> to vector<8x16xf32>
    %286 = vector.extract_strided_slice %282 {offsets = [0, 16], sizes = [8, 16], strides = [1, 1]} : vector<8x48xf32> to vector<8x16xf32>
    %287 = vector.extract_strided_slice %282 {offsets = [0, 32], sizes = [8, 16], strides = [1, 1]} : vector<8x48xf32> to vector<8x16xf32>
    %288 = arith.mulf %286, %271 : vector<8x16xf32>
    %289 = arith.mulf %285, %284 : vector<8x16xf32>
    %290 = arith.addf %288, %289 : vector<8x16xf32>
    %291 = math.tanh %290 : vector<8x16xf32>
    %292 = arith.mulf %287, %291 : vector<8x16xf32>
    %293 = vector.extract_strided_slice %36 {offsets = [8, 0], sizes = [8, 64], strides = [1, 1]} : vector<64x64xf32> to vector<8x64xf32>
    %cst_51 = arith.constant dense<0.000000e+00> : vector<8x64xf32>
    %294 = tpu.matmul %292, %5, %cst_51 {dimension_numbers = #tpu.dot_dimension_numbers<[1], [0], [0], [1], [0, 0, 1, 1], [], []>} : vector<8x16xf32>, vector<16x64xf32>, vector<8x64xf32> -> vector<8x64xf32>
    %295 = arith.addf %293, %294 : vector<8x64xf32>
    %296 = vector.extract_strided_slice %295 {offsets = [0, 0], sizes = [8, 48], strides = [1, 1]} : vector<8x64xf32> to vector<8x48xf32>
    %297 = arith.negf %296 : vector<8x48xf32>
    %298 = math.exp %297 : vector<8x48xf32>
    %cst_52 = arith.constant 1.000000e+00 : f32
    %299 = vector.broadcast %cst_52 : f32 to vector<8x48xf32>
    %300 = arith.addf %299, %298 : vector<8x48xf32>
    %301 = arith.divf %299, %300 : vector<8x48xf32>
    %302 = vector.extract_strided_slice %295 {offsets = [0, 48], sizes = [8, 16], strides = [1, 1]} : vector<8x64xf32> to vector<8x16xf32>
    %303 = math.tanh %302 : vector<8x16xf32>
    %304 = vector.extract_strided_slice %301 {offsets = [0, 0], sizes = [8, 16], strides = [1, 1]} : vector<8x48xf32> to vector<8x16xf32>
    %305 = vector.extract_strided_slice %301 {offsets = [0, 16], sizes = [8, 16], strides = [1, 1]} : vector<8x48xf32> to vector<8x16xf32>
    %306 = vector.extract_strided_slice %301 {offsets = [0, 32], sizes = [8, 16], strides = [1, 1]} : vector<8x48xf32> to vector<8x16xf32>
    %307 = arith.mulf %305, %290 : vector<8x16xf32>
    %308 = arith.mulf %304, %303 : vector<8x16xf32>
    %309 = arith.addf %307, %308 : vector<8x16xf32>
    %310 = math.tanh %309 : vector<8x16xf32>
    %311 = arith.mulf %306, %310 : vector<8x16xf32>
    %312 = vector.extract_strided_slice %36 {offsets = [0, 0], sizes = [8, 64], strides = [1, 1]} : vector<64x64xf32> to vector<8x64xf32>
    %cst_53 = arith.constant dense<0.000000e+00> : vector<8x64xf32>
    %313 = tpu.matmul %311, %5, %cst_53 {dimension_numbers = #tpu.dot_dimension_numbers<[1], [0], [0], [1], [0, 0, 1, 1], [], []>} : vector<8x16xf32>, vector<16x64xf32>, vector<8x64xf32> -> vector<8x64xf32>
    %314 = arith.addf %312, %313 : vector<8x64xf32>
    %315 = vector.extract_strided_slice %314 {offsets = [0, 0], sizes = [8, 48], strides = [1, 1]} : vector<8x64xf32> to vector<8x48xf32>
    %316 = arith.negf %315 : vector<8x48xf32>
    %317 = math.exp %316 : vector<8x48xf32>
    %cst_54 = arith.constant 1.000000e+00 : f32
    %318 = vector.broadcast %cst_54 : f32 to vector<8x48xf32>
    %319 = arith.addf %318, %317 : vector<8x48xf32>
    %320 = arith.divf %318, %319 : vector<8x48xf32>
    %321 = vector.extract_strided_slice %314 {offsets = [0, 48], sizes = [8, 16], strides = [1, 1]} : vector<8x64xf32> to vector<8x16xf32>
    %322 = math.tanh %321 : vector<8x16xf32>
    %323 = vector.extract_strided_slice %320 {offsets = [0, 0], sizes = [8, 16], strides = [1, 1]} : vector<8x48xf32> to vector<8x16xf32>
    %324 = vector.extract_strided_slice %320 {offsets = [0, 16], sizes = [8, 16], strides = [1, 1]} : vector<8x48xf32> to vector<8x16xf32>
    %325 = vector.extract_strided_slice %320 {offsets = [0, 32], sizes = [8, 16], strides = [1, 1]} : vector<8x48xf32> to vector<8x16xf32>
    %326 = arith.mulf %324, %309 : vector<8x16xf32>
    %327 = arith.mulf %323, %322 : vector<8x16xf32>
    %328 = arith.addf %326, %327 : vector<8x16xf32>
    %329 = math.tanh %328 : vector<8x16xf32>
    %330 = arith.mulf %325, %329 : vector<8x16xf32>
    %331 = tpu.concatenate %50, %69, %88, %107, %126, %145, %164, %183 in 0 : vector<8x16xf32>, vector<8x16xf32>, vector<8x16xf32>, vector<8x16xf32>, vector<8x16xf32>, vector<8x16xf32>, vector<8x16xf32>, vector<8x16xf32> -> vector<64x16xf32>
    %332 = tpu.concatenate %330, %311, %292, %273, %254, %235, %216, %197 in 0 : vector<8x16xf32>, vector<8x16xf32>, vector<8x16xf32>, vector<8x16xf32>, vector<8x16xf32>, vector<8x16xf32>, vector<8x16xf32>, vector<8x16xf32> -> vector<64x16xf32>
    %cst_55 = arith.constant dense<0.000000e+00> : vector<64x128xf32>
    %333 = tpu.matmul %331, %2, %cst_55 {dimension_numbers = #tpu.dot_dimension_numbers<[1], [0], [0], [1], [0, 0, 1, 1], [], []>} : vector<64x16xf32>, vector<16x128xf32>, vector<64x128xf32> -> vector<64x128xf32>
    %cst_56 = arith.constant dense<0.000000e+00> : vector<64x128xf32>
    %334 = tpu.matmul %332, %3, %cst_56 {dimension_numbers = #tpu.dot_dimension_numbers<[1], [0], [0], [1], [0, 0, 1, 1], [], []>} : vector<64x16xf32>, vector<16x128xf32>, vector<64x128xf32> -> vector<64x128xf32>
    %335 = arith.addf %333, %334 : vector<64x128xf32>
    %336 = vector.broadcast %13 : vector<1x128xf32> to vector<64x128xf32>
    %337 = arith.addf %335, %336 : vector<64x128xf32>
    %338 = vector.extract_strided_slice %337 {offsets = [0, 0], sizes = [64, 64], strides = [1, 1]} : vector<64x128xf32> to vector<64x64xf32>
    %339 = vector.extract_strided_slice %338 {offsets = [0, 0], sizes = [8, 64], strides = [1, 1]} : vector<64x64xf32> to vector<8x64xf32>
    %340 = vector.extract_strided_slice %339 {offsets = [0, 0], sizes = [8, 48], strides = [1, 1]} : vector<8x64xf32> to vector<8x48xf32>
    %341 = arith.negf %340 : vector<8x48xf32>
    %342 = math.exp %341 : vector<8x48xf32>
    %cst_57 = arith.constant 1.000000e+00 : f32
    %343 = vector.broadcast %cst_57 : f32 to vector<8x48xf32>
    %344 = arith.addf %343, %342 : vector<8x48xf32>
    %345 = arith.divf %343, %344 : vector<8x48xf32>
    %346 = vector.extract_strided_slice %339 {offsets = [0, 48], sizes = [8, 16], strides = [1, 1]} : vector<8x64xf32> to vector<8x16xf32>
    %347 = math.tanh %346 : vector<8x16xf32>
    %348 = vector.extract_strided_slice %345 {offsets = [0, 0], sizes = [8, 16], strides = [1, 1]} : vector<8x48xf32> to vector<8x16xf32>
    %349 = vector.extract_strided_slice %345 {offsets = [0, 32], sizes = [8, 16], strides = [1, 1]} : vector<8x48xf32> to vector<8x16xf32>
    %350 = arith.mulf %348, %347 : vector<8x16xf32>
    %351 = math.tanh %350 : vector<8x16xf32>
    %352 = arith.mulf %349, %351 : vector<8x16xf32>
    %353 = vector.extract_strided_slice %338 {offsets = [8, 0], sizes = [8, 64], strides = [1, 1]} : vector<64x64xf32> to vector<8x64xf32>
    %cst_58 = arith.constant dense<0.000000e+00> : vector<8x64xf32>
    %354 = tpu.matmul %352, %6, %cst_58 {dimension_numbers = #tpu.dot_dimension_numbers<[1], [0], [0], [1], [0, 0, 1, 1], [], []>} : vector<8x16xf32>, vector<16x64xf32>, vector<8x64xf32> -> vector<8x64xf32>
    %355 = arith.addf %353, %354 : vector<8x64xf32>
    %356 = vector.extract_strided_slice %355 {offsets = [0, 0], sizes = [8, 48], strides = [1, 1]} : vector<8x64xf32> to vector<8x48xf32>
    %357 = arith.negf %356 : vector<8x48xf32>
    %358 = math.exp %357 : vector<8x48xf32>
    %cst_59 = arith.constant 1.000000e+00 : f32
    %359 = vector.broadcast %cst_59 : f32 to vector<8x48xf32>
    %360 = arith.addf %359, %358 : vector<8x48xf32>
    %361 = arith.divf %359, %360 : vector<8x48xf32>
    %362 = vector.extract_strided_slice %355 {offsets = [0, 48], sizes = [8, 16], strides = [1, 1]} : vector<8x64xf32> to vector<8x16xf32>
    %363 = math.tanh %362 : vector<8x16xf32>
    %364 = vector.extract_strided_slice %361 {offsets = [0, 0], sizes = [8, 16], strides = [1, 1]} : vector<8x48xf32> to vector<8x16xf32>
    %365 = vector.extract_strided_slice %361 {offsets = [0, 16], sizes = [8, 16], strides = [1, 1]} : vector<8x48xf32> to vector<8x16xf32>
    %366 = vector.extract_strided_slice %361 {offsets = [0, 32], sizes = [8, 16], strides = [1, 1]} : vector<8x48xf32> to vector<8x16xf32>
    %367 = arith.mulf %365, %350 : vector<8x16xf32>
    %368 = arith.mulf %364, %363 : vector<8x16xf32>
    %369 = arith.addf %367, %368 : vector<8x16xf32>
    %370 = math.tanh %369 : vector<8x16xf32>
    %371 = arith.mulf %366, %370 : vector<8x16xf32>
    %372 = vector.extract_strided_slice %338 {offsets = [16, 0], sizes = [8, 64], strides = [1, 1]} : vector<64x64xf32> to vector<8x64xf32>
    %cst_60 = arith.constant dense<0.000000e+00> : vector<8x64xf32>
    %373 = tpu.matmul %371, %6, %cst_60 {dimension_numbers = #tpu.dot_dimension_numbers<[1], [0], [0], [1], [0, 0, 1, 1], [], []>} : vector<8x16xf32>, vector<16x64xf32>, vector<8x64xf32> -> vector<8x64xf32>
    %374 = arith.addf %372, %373 : vector<8x64xf32>
    %375 = vector.extract_strided_slice %374 {offsets = [0, 0], sizes = [8, 48], strides = [1, 1]} : vector<8x64xf32> to vector<8x48xf32>
    %376 = arith.negf %375 : vector<8x48xf32>
    %377 = math.exp %376 : vector<8x48xf32>
    %cst_61 = arith.constant 1.000000e+00 : f32
    %378 = vector.broadcast %cst_61 : f32 to vector<8x48xf32>
    %379 = arith.addf %378, %377 : vector<8x48xf32>
    %380 = arith.divf %378, %379 : vector<8x48xf32>
    %381 = vector.extract_strided_slice %374 {offsets = [0, 48], sizes = [8, 16], strides = [1, 1]} : vector<8x64xf32> to vector<8x16xf32>
    %382 = math.tanh %381 : vector<8x16xf32>
    %383 = vector.extract_strided_slice %380 {offsets = [0, 0], sizes = [8, 16], strides = [1, 1]} : vector<8x48xf32> to vector<8x16xf32>
    %384 = vector.extract_strided_slice %380 {offsets = [0, 16], sizes = [8, 16], strides = [1, 1]} : vector<8x48xf32> to vector<8x16xf32>
    %385 = vector.extract_strided_slice %380 {offsets = [0, 32], sizes = [8, 16], strides = [1, 1]} : vector<8x48xf32> to vector<8x16xf32>
    %386 = arith.mulf %384, %369 : vector<8x16xf32>
    %387 = arith.mulf %383, %382 : vector<8x16xf32>
    %388 = arith.addf %386, %387 : vector<8x16xf32>
    %389 = math.tanh %388 : vector<8x16xf32>
    %390 = arith.mulf %385, %389 : vector<8x16xf32>
    %391 = vector.extract_strided_slice %338 {offsets = [24, 0], sizes = [8, 64], strides = [1, 1]} : vector<64x64xf32> to vector<8x64xf32>
    %cst_62 = arith.constant dense<0.000000e+00> : vector<8x64xf32>
    %392 = tpu.matmul %390, %6, %cst_62 {dimension_numbers = #tpu.dot_dimension_numbers<[1], [0], [0], [1], [0, 0, 1, 1], [], []>} : vector<8x16xf32>, vector<16x64xf32>, vector<8x64xf32> -> vector<8x64xf32>
    %393 = arith.addf %391, %392 : vector<8x64xf32>
    %394 = vector.extract_strided_slice %393 {offsets = [0, 0], sizes = [8, 48], strides = [1, 1]} : vector<8x64xf32> to vector<8x48xf32>
    %395 = arith.negf %394 : vector<8x48xf32>
    %396 = math.exp %395 : vector<8x48xf32>
    %cst_63 = arith.constant 1.000000e+00 : f32
    %397 = vector.broadcast %cst_63 : f32 to vector<8x48xf32>
    %398 = arith.addf %397, %396 : vector<8x48xf32>
    %399 = arith.divf %397, %398 : vector<8x48xf32>
    %400 = vector.extract_strided_slice %393 {offsets = [0, 48], sizes = [8, 16], strides = [1, 1]} : vector<8x64xf32> to vector<8x16xf32>
    %401 = math.tanh %400 : vector<8x16xf32>
    %402 = vector.extract_strided_slice %399 {offsets = [0, 0], sizes = [8, 16], strides = [1, 1]} : vector<8x48xf32> to vector<8x16xf32>
    %403 = vector.extract_strided_slice %399 {offsets = [0, 16], sizes = [8, 16], strides = [1, 1]} : vector<8x48xf32> to vector<8x16xf32>
    %404 = vector.extract_strided_slice %399 {offsets = [0, 32], sizes = [8, 16], strides = [1, 1]} : vector<8x48xf32> to vector<8x16xf32>
    %405 = arith.mulf %403, %388 : vector<8x16xf32>
    %406 = arith.mulf %402, %401 : vector<8x16xf32>
    %407 = arith.addf %405, %406 : vector<8x16xf32>
    %408 = math.tanh %407 : vector<8x16xf32>
    %409 = arith.mulf %404, %408 : vector<8x16xf32>
    %410 = vector.extract_strided_slice %338 {offsets = [32, 0], sizes = [8, 64], strides = [1, 1]} : vector<64x64xf32> to vector<8x64xf32>
    %cst_64 = arith.constant dense<0.000000e+00> : vector<8x64xf32>
    %411 = tpu.matmul %409, %6, %cst_64 {dimension_numbers = #tpu.dot_dimension_numbers<[1], [0], [0], [1], [0, 0, 1, 1], [], []>} : vector<8x16xf32>, vector<16x64xf32>, vector<8x64xf32> -> vector<8x64xf32>
    %412 = arith.addf %410, %411 : vector<8x64xf32>
    %413 = vector.extract_strided_slice %412 {offsets = [0, 0], sizes = [8, 48], strides = [1, 1]} : vector<8x64xf32> to vector<8x48xf32>
    %414 = arith.negf %413 : vector<8x48xf32>
    %415 = math.exp %414 : vector<8x48xf32>
    %cst_65 = arith.constant 1.000000e+00 : f32
    %416 = vector.broadcast %cst_65 : f32 to vector<8x48xf32>
    %417 = arith.addf %416, %415 : vector<8x48xf32>
    %418 = arith.divf %416, %417 : vector<8x48xf32>
    %419 = vector.extract_strided_slice %412 {offsets = [0, 48], sizes = [8, 16], strides = [1, 1]} : vector<8x64xf32> to vector<8x16xf32>
    %420 = math.tanh %419 : vector<8x16xf32>
    %421 = vector.extract_strided_slice %418 {offsets = [0, 0], sizes = [8, 16], strides = [1, 1]} : vector<8x48xf32> to vector<8x16xf32>
    %422 = vector.extract_strided_slice %418 {offsets = [0, 16], sizes = [8, 16], strides = [1, 1]} : vector<8x48xf32> to vector<8x16xf32>
    %423 = vector.extract_strided_slice %418 {offsets = [0, 32], sizes = [8, 16], strides = [1, 1]} : vector<8x48xf32> to vector<8x16xf32>
    %424 = arith.mulf %422, %407 : vector<8x16xf32>
    %425 = arith.mulf %421, %420 : vector<8x16xf32>
    %426 = arith.addf %424, %425 : vector<8x16xf32>
    %427 = math.tanh %426 : vector<8x16xf32>
    %428 = arith.mulf %423, %427 : vector<8x16xf32>
    %429 = vector.extract_strided_slice %338 {offsets = [40, 0], sizes = [8, 64], strides = [1, 1]} : vector<64x64xf32> to vector<8x64xf32>
    %cst_66 = arith.constant dense<0.000000e+00> : vector<8x64xf32>
    %430 = tpu.matmul %428, %6, %cst_66 {dimension_numbers = #tpu.dot_dimension_numbers<[1], [0], [0], [1], [0, 0, 1, 1], [], []>} : vector<8x16xf32>, vector<16x64xf32>, vector<8x64xf32> -> vector<8x64xf32>
    %431 = arith.addf %429, %430 : vector<8x64xf32>
    %432 = vector.extract_strided_slice %431 {offsets = [0, 0], sizes = [8, 48], strides = [1, 1]} : vector<8x64xf32> to vector<8x48xf32>
    %433 = arith.negf %432 : vector<8x48xf32>
    %434 = math.exp %433 : vector<8x48xf32>
    %cst_67 = arith.constant 1.000000e+00 : f32
    %435 = vector.broadcast %cst_67 : f32 to vector<8x48xf32>
    %436 = arith.addf %435, %434 : vector<8x48xf32>
    %437 = arith.divf %435, %436 : vector<8x48xf32>
    %438 = vector.extract_strided_slice %431 {offsets = [0, 48], sizes = [8, 16], strides = [1, 1]} : vector<8x64xf32> to vector<8x16xf32>
    %439 = math.tanh %438 : vector<8x16xf32>
    %440 = vector.extract_strided_slice %437 {offsets = [0, 0], sizes = [8, 16], strides = [1, 1]} : vector<8x48xf32> to vector<8x16xf32>
    %441 = vector.extract_strided_slice %437 {offsets = [0, 16], sizes = [8, 16], strides = [1, 1]} : vector<8x48xf32> to vector<8x16xf32>
    %442 = vector.extract_strided_slice %437 {offsets = [0, 32], sizes = [8, 16], strides = [1, 1]} : vector<8x48xf32> to vector<8x16xf32>
    %443 = arith.mulf %441, %426 : vector<8x16xf32>
    %444 = arith.mulf %440, %439 : vector<8x16xf32>
    %445 = arith.addf %443, %444 : vector<8x16xf32>
    %446 = math.tanh %445 : vector<8x16xf32>
    %447 = arith.mulf %442, %446 : vector<8x16xf32>
    %448 = vector.extract_strided_slice %338 {offsets = [48, 0], sizes = [8, 64], strides = [1, 1]} : vector<64x64xf32> to vector<8x64xf32>
    %cst_68 = arith.constant dense<0.000000e+00> : vector<8x64xf32>
    %449 = tpu.matmul %447, %6, %cst_68 {dimension_numbers = #tpu.dot_dimension_numbers<[1], [0], [0], [1], [0, 0, 1, 1], [], []>} : vector<8x16xf32>, vector<16x64xf32>, vector<8x64xf32> -> vector<8x64xf32>
    %450 = arith.addf %448, %449 : vector<8x64xf32>
    %451 = vector.extract_strided_slice %450 {offsets = [0, 0], sizes = [8, 48], strides = [1, 1]} : vector<8x64xf32> to vector<8x48xf32>
    %452 = arith.negf %451 : vector<8x48xf32>
    %453 = math.exp %452 : vector<8x48xf32>
    %cst_69 = arith.constant 1.000000e+00 : f32
    %454 = vector.broadcast %cst_69 : f32 to vector<8x48xf32>
    %455 = arith.addf %454, %453 : vector<8x48xf32>
    %456 = arith.divf %454, %455 : vector<8x48xf32>
    %457 = vector.extract_strided_slice %450 {offsets = [0, 48], sizes = [8, 16], strides = [1, 1]} : vector<8x64xf32> to vector<8x16xf32>
    %458 = math.tanh %457 : vector<8x16xf32>
    %459 = vector.extract_strided_slice %456 {offsets = [0, 0], sizes = [8, 16], strides = [1, 1]} : vector<8x48xf32> to vector<8x16xf32>
    %460 = vector.extract_strided_slice %456 {offsets = [0, 16], sizes = [8, 16], strides = [1, 1]} : vector<8x48xf32> to vector<8x16xf32>
    %461 = vector.extract_strided_slice %456 {offsets = [0, 32], sizes = [8, 16], strides = [1, 1]} : vector<8x48xf32> to vector<8x16xf32>
    %462 = arith.mulf %460, %445 : vector<8x16xf32>
    %463 = arith.mulf %459, %458 : vector<8x16xf32>
    %464 = arith.addf %462, %463 : vector<8x16xf32>
    %465 = math.tanh %464 : vector<8x16xf32>
    %466 = arith.mulf %461, %465 : vector<8x16xf32>
    %467 = vector.extract_strided_slice %338 {offsets = [56, 0], sizes = [8, 64], strides = [1, 1]} : vector<64x64xf32> to vector<8x64xf32>
    %cst_70 = arith.constant dense<0.000000e+00> : vector<8x64xf32>
    %468 = tpu.matmul %466, %6, %cst_70 {dimension_numbers = #tpu.dot_dimension_numbers<[1], [0], [0], [1], [0, 0, 1, 1], [], []>} : vector<8x16xf32>, vector<16x64xf32>, vector<8x64xf32> -> vector<8x64xf32>
    %469 = arith.addf %467, %468 : vector<8x64xf32>
    %470 = vector.extract_strided_slice %469 {offsets = [0, 0], sizes = [8, 48], strides = [1, 1]} : vector<8x64xf32> to vector<8x48xf32>
    %471 = arith.negf %470 : vector<8x48xf32>
    %472 = math.exp %471 : vector<8x48xf32>
    %cst_71 = arith.constant 1.000000e+00 : f32
    %473 = vector.broadcast %cst_71 : f32 to vector<8x48xf32>
    %474 = arith.addf %473, %472 : vector<8x48xf32>
    %475 = arith.divf %473, %474 : vector<8x48xf32>
    %476 = vector.extract_strided_slice %469 {offsets = [0, 48], sizes = [8, 16], strides = [1, 1]} : vector<8x64xf32> to vector<8x16xf32>
    %477 = math.tanh %476 : vector<8x16xf32>
    %478 = vector.extract_strided_slice %475 {offsets = [0, 0], sizes = [8, 16], strides = [1, 1]} : vector<8x48xf32> to vector<8x16xf32>
    %479 = vector.extract_strided_slice %475 {offsets = [0, 16], sizes = [8, 16], strides = [1, 1]} : vector<8x48xf32> to vector<8x16xf32>
    %480 = vector.extract_strided_slice %475 {offsets = [0, 32], sizes = [8, 16], strides = [1, 1]} : vector<8x48xf32> to vector<8x16xf32>
    %481 = arith.mulf %479, %464 : vector<8x16xf32>
    %482 = arith.mulf %478, %477 : vector<8x16xf32>
    %483 = arith.addf %481, %482 : vector<8x16xf32>
    %484 = math.tanh %483 : vector<8x16xf32>
    %485 = arith.mulf %480, %484 : vector<8x16xf32>
    %486 = vector.extract_strided_slice %337 {offsets = [56, 64], sizes = [8, 64], strides = [1, 1]} : vector<64x128xf32> to vector<8x64xf32>
    %487 = vector.extract_strided_slice %486 {offsets = [0, 0], sizes = [8, 48], strides = [1, 1]} : vector<8x64xf32> to vector<8x48xf32>
    %488 = arith.negf %487 : vector<8x48xf32>
    %489 = math.exp %488 : vector<8x48xf32>
    %cst_72 = arith.constant 1.000000e+00 : f32
    %490 = vector.broadcast %cst_72 : f32 to vector<8x48xf32>
    %491 = arith.addf %490, %489 : vector<8x48xf32>
    %492 = arith.divf %490, %491 : vector<8x48xf32>
    %493 = vector.extract_strided_slice %486 {offsets = [0, 48], sizes = [8, 16], strides = [1, 1]} : vector<8x64xf32> to vector<8x16xf32>
    %494 = math.tanh %493 : vector<8x16xf32>
    %495 = vector.extract_strided_slice %492 {offsets = [0, 32], sizes = [8, 16], strides = [1, 1]} : vector<8x48xf32> to vector<8x16xf32>
    %496 = vector.extract_strided_slice %492 {offsets = [0, 0], sizes = [8, 16], strides = [1, 1]} : vector<8x48xf32> to vector<8x16xf32>
    %497 = arith.mulf %496, %494 : vector<8x16xf32>
    %498 = math.tanh %497 : vector<8x16xf32>
    %499 = arith.mulf %495, %498 : vector<8x16xf32>
    %cst_73 = arith.constant dense<0.000000e+00> : vector<8x64xf32>
    %500 = tpu.matmul %485, %7, %cst_73 {dimension_numbers = #tpu.dot_dimension_numbers<[1], [0], [0], [1], [0, 0, 1, 1], [], []>} : vector<8x16xf32>, vector<16x64xf32>, vector<8x64xf32> -> vector<8x64xf32>
    %501 = arith.addf %31, %500 : vector<8x64xf32>
    %cst_74 = arith.constant dense<0.000000e+00> : vector<8x64xf32>
    %502 = tpu.matmul %499, %8, %cst_74 {dimension_numbers = #tpu.dot_dimension_numbers<[1], [0], [0], [1], [0, 0, 1, 1], [], []>} : vector<8x16xf32>, vector<16x64xf32>, vector<8x64xf32> -> vector<8x64xf32>
    %503 = arith.addf %501, %502 : vector<8x64xf32>
    %cst_75 = arith.constant 0.000000e+00 : f32
    %504 = vector.broadcast %cst_75 : f32 to vector<8x64xf32>
    %505 = arith.cmpf ogt, %503, %504 : vector<8x64xf32>
    %cst_76 = arith.constant 0.00999999977 : f32
    %506 = vector.broadcast %cst_76 : f32 to vector<8x64xf32>
    %507 = arith.mulf %506, %503 : vector<8x64xf32>
    %508 = arith.select %505, %503, %507 : vector<8x64xi1>, vector<8x64xf32>
    %cst_77 = arith.constant dense<0.000000e+00> : vector<8x128xf32>
    %509 = tpu.matmul %508, %11, %cst_77 {dimension_numbers = #tpu.dot_dimension_numbers<[1], [0], [0], [1], [0, 0, 1, 1], [], []>} : vector<8x64xf32>, vector<64x128xf32>, vector<8x128xf32> -> vector<8x128xf32>
    %510 = vector.broadcast %15 : vector<1x128xf32> to vector<8x128xf32>
    %511 = arith.addf %509, %510 : vector<8x128xf32>
    %c0_78 = arith.constant 0 : index
    %c0_79 = arith.constant 0 : index
    %512 = vector.load %arg3[%c0_78, %c0_79] : memref<8x128xf32, #tpu.memory_space<vmem>>, vector<8x128xf32>
    tpu.vector_store %arg3[%c0_78, %c0_79], %511 {strides = array<i32>} : memref<8x128xf32, #tpu.memory_space<vmem>>, vector<8x128xf32>,
    return
  }
}

</mosaic_0001>

<llo_original>
// kernel: sgke_sg_e_forward.1
$region0: #{sgke_sg_e_forward.1}
  #allocation0 [shape = 'u32[]', space=smem, size = 0x4, offset = 0x4, fixed_abs, tag = 'smem constant byte address 0x4 - core index']
  #allocation1 [shape = 'u32[72,128]{1,0:T(1,128)}', space=vmem, size = 0x9000, scoped, tag = 'internal scratch']
  %s0 = inlined_call_operand.vmem [shape: s32[64,1], index: 0, kind: input, shape index: {}]
  %s1 = inlined_call_operand.vmem [shape: f32[16,16,48], index: 1, kind: input, shape index: {}]
  %s2 = inlined_call_operand.vmem [shape: f32[440,128], index: 2, kind: input, shape index: {}]
  %s3 = inlined_call_operand.vmem [shape: f32[8,128], index: 3, kind: output, shape index: {}]
  %s4 = sld [smem:[#allocation0]]
  $region22: #{sgke_sg_e_forward.1} parent=0
    _
  %s6 = ssub.s32 1, %s4
  %s7 = scalar_select 0, %s6, %s4
  // Predicated region
  $region2: #{sgke_sg_e_forward.1} parent=0 // pred_check
    _
  $region3: #{sgke_sg_e_forward.1} parent=0 // pred_check_branch
    %9 = sbr.rel (0) target = $region5
  $region4: #{sgke_sg_e_forward.1} parent=0 // pred_region
    _
  $region5: #{sgke_sg_e_forward.1} parent=0 // pred_fallthru
    _
  // Predicated region
  $region6: #{sgke_sg_e_forward.1} parent=0 // pred_check
    _
  $region7: #{sgke_sg_e_forward.1} parent=0 // pred_check_branch
    %11 = sbr.rel (0) target = $region9
  $region8: #{sgke_sg_e_forward.1} parent=0 // pred_region
    _
  $region9: #{sgke_sg_e_forward.1} parent=0 // pred_fallthru
    _
  // Predicated region
  $region10: #{sgke_sg_e_forward.1} parent=0 // pred_check
    _
  $region11: #{sgke_sg_e_forward.1} parent=0 // pred_check_branch
    %13 = sbr.rel (0) target = $region13
  $region12: #{sgke_sg_e_forward.1} parent=0 // pred_region
    _
  $region13: #{sgke_sg_e_forward.1} parent=0 // pred_fallthru
    _
  %v14 = vld [vmem:[%s2] sm:$0xff]
  %v15 = vld [vmem:[%s2 + $0x8] sm:$0xff]
  %v16 = vld [vmem:[%s2 + $0x10] sm:$0xff]
  %v17 = vld [vmem:[%s2 + $0x18] sm:$0xff]
  %v18 = vld [vmem:[%s2 + $0x20] sm:$0xff]
  %v19 = vld [vmem:[%s2 + $0x28] sm:$0xff]
  %v20 = vld [vmem:[%s2 + $0x30] sm:$0xff]
  %v21 = vld [vmem:[%s2 + $0x38] sm:$0xff]
  %v22 = vld [vmem:[%s2 + $0x40] sm:$0xff]
  %v23 = vld [vmem:[%s2 + $0x48] sm:$0xff]
  %v24 = vld [vmem:[%s2 + $0x50] sm:$0xff]
  %v25 = vld [vmem:[%s2 + $0x58] sm:$0xff]
  %v26 = vld [vmem:[%s2 + $0x60] sm:$0xff]
  %v27 = vld [vmem:[%s2 + $0x68] sm:$0xff]
  %v28 = vld [vmem:[%s2 + $0x70] sm:$0xff]
  %v29 = vld [vmem:[%s2 + $0x78] sm:$0xff]
  %v30 = vld [vmem:[%s2 + $0x80] sm:$0xff]
  %v31 = vld [vmem:[%s2 + $0x88] sm:$0xff]
  %v32 = vld [vmem:[%s2 + $0x90] sm:$0xff]
  %v33 = vld [vmem:[%s2 + $0x98] sm:$0xff]
  %v34 = vld [vmem:[%s2 + $0xa0] sm:$0xff]
  %v35 = vld [vmem:[%s2 + $0xa8] sm:$0xff]
  %v36 = vld [vmem:[%s2 + $0xb0] sm:$0xff]
  %v37 = vld [vmem:[%s2 + $0xb8] sm:$0xff]
  %v38 = vld [vmem:[%s2 + $0xc0] sm:$0xff]
  %v39 = vld [vmem:[%s2 + $0xc8] sm:$0xff]
  %v40 = vld [vmem:[%s2 + $0xd0] sm:$0xff]
  %v41 = vld [vmem:[%s2 + $0xd8] sm:$0xff]
  %v42 = vld [vmem:[%s2 + $0xe0] sm:$0xff]
  %v43 = vld [vmem:[%s2 + $0xe8] sm:$0xff]
  %v44 = vld [vmem:[%s2 + $0xf0] sm:$0xff]
  %v45 = vld [vmem:[%s2 + $0xf8] sm:$0xff]
  %v46 = vld [vmem:[%s2 + $0x100] sm:$0xff]
  %v47 = vld [vmem:[%s2 + $0x108] sm:$0xff]
  %v48 = vld [vmem:[%s2 + $0x110] sm:$0xff]
  %v49 = vld [vmem:[%s2 + $0x118] sm:$0xff]
  %v50 = vld [vmem:[%s2 + $0x120] sm:$0xff]
  %v51 = vld [vmem:[%s2 + $0x128] sm:$0xff]
  %v52 = vld [vmem:[%s2 + $0x130] sm:$0xff]
  %v53 = vld [vmem:[%s2 + $0x138] sm:$0xff]
  %v54 = vld [vmem:[%s2 + $0x140] sm:$0xff]
  %v55 = vld [vmem:[%s2 + $0x148] sm:$0xff]
  %v56 = vld [vmem:[%s2 + $0x150] sm:$0xff]
  %v57 = vld [vmem:[%s2 + $0x158] sm:$0xff]
  %v58 = vld [vmem:[%s2 + $0x160] sm:$0xff]
  %v59 = vld [vmem:[%s2 + $0x168] sm:$0xff]
  %v60 = vld [vmem:[%s2 + $0x170] sm:$0xff]
  %v61 = vld [vmem:[%s2 + $0x178] sm:$0xff]
  %v62 = vld [vmem:[%s2 + $0x180] sm:$0xff]
  %v63 = vld [vmem:[%s2 + $0x188] sm:$0xff]
  %v64 = vld [vmem:[%s2 + $0x190] sm:$0xff]
  %v65 = vld [vmem:[%s2 + $0x198] sm:$0xff]
  %v66 = vld [vmem:[%s2 + $0x1a0] sm:$0xff]
  %v67 = vld [vmem:[%s2 + $0x1a8] sm:$0xff]
  %v68 = vld [vmem:[%s2 + $0x1b0] sm:$0x1]
  %v69 = vld [vmem:[%s2 + $0x1b1] sm:$0x1]
  %v70 = vld [vmem:[%s2 + $0x1b2] sm:$0x1]
  %v71 = vld [vmem:[%s2 + $0x1b3] sm:$0x1]
  %v72 = vld [vmem:[%s0] sm:$0xff]
  %v73 = vld [vmem:[%s0 + $0x8] sm:$0xff]
  %v74 = vld [vmem:[%s0 + $0x10] sm:$0xff]
  %v75 = vld [vmem:[%s0 + $0x18] sm:$0xff]
  %v76 = vld [vmem:[%s0 + $0x20] sm:$0xff]
  %v77 = vld [vmem:[%s0 + $0x28] sm:$0xff]
  %v78 = vld [vmem:[%s0 + $0x30] sm:$0xff]
  %v79 = vld [vmem:[%s0 + $0x38] sm:$0xff]
  %v80 = vlaneseq
  %v81 = vand.u32 %v80, 127
  %82 = vset.pattern.permute.xlu0 0
  %83 = vperm.xlu0 %82, %v72
  %v84 = vpop.permute.xlu0 %83
  %85 = vset.pattern.permute.xlu0 0
  %86 = vperm.xlu0 %85, %v73
  %v87 = vpop.permute.xlu0 %86
  %88 = vset.pattern.permute.xlu0 0
  %89 = vperm.xlu0 %88, %v74
  %v90 = vpop.permute.xlu0 %89
  %91 = vset.pattern.permute.xlu0 0
  %92 = vperm.xlu0 %91, %v75
  %v93 = vpop.permute.xlu0 %92
  %94 = vset.pattern.permute.xlu0 0
  %95 = vperm.xlu0 %94, %v76
  %v96 = vpop.permute.xlu0 %95
  %97 = vset.pattern.permute.xlu0 0
  %98 = vperm.xlu0 %97, %v77
  %v99 = vpop.permute.xlu0 %98
  %100 = vset.pattern.permute.xlu0 0
  %101 = vperm.xlu0 %100, %v78
  %v102 = vpop.permute.xlu0 %101
  %103 = vset.pattern.permute.xlu0 0
  %104 = vperm.xlu0 %103, %v79
  %v105 = vpop.permute.xlu0 %104
  %vm106 = vcmp.eq.s32.totalorder %v84, %v81
  %vm107 = vcmp.eq.s32.totalorder %v87, %v81
  %vm108 = vcmp.eq.s32.totalorder %v90, %v81
  %vm109 = vcmp.eq.s32.totalorder %v93, %v81
  %vm110 = vcmp.eq.s32.totalorder %v96, %v81
  %vm111 = vcmp.eq.s32.totalorder %v99, %v81
  %vm112 = vcmp.eq.s32.totalorder %v102, %v81
  %vm113 = vcmp.eq.s32.totalorder %v105, %v81
  %v114 = vsel %vm106, 1, 0
  %v115 = vsel %vm107, 1, 0
  %v116 = vsel %vm108, 1, 0
  %v117 = vsel %vm109, 1, 0
  %v118 = vsel %vm110, 1, 0
  %v119 = vsel %vm111, 1, 0
  %v120 = vsel %vm112, 1, 0
  %v121 = vsel %vm113, 1, 0
  %v122 = vcvt.s32.f32 %v114
  %v123 = vcvt.s32.f32 %v115
  %v124 = vcvt.s32.f32 %v116
  %v125 = vcvt.s32.f32 %v117
  %v126 = vcvt.s32.f32 %v118
  %v127 = vcvt.s32.f32 %v119
  %v128 = vcvt.s32.f32 %v120
  %v129 = vcvt.s32.f32 %v121
  %130 = vmatpush.msra.mxu0 %v29
  %131 = vmatpush.msra.mxu0 %v28
  %132 = vmatpush.msra.mxu0 %v27
  %133 = vmatpush.msra.mxu0 %v26
  %134 = vmatpush.msra.mxu0 %v25
  %135 = vmatpush.msra.mxu0 %v24
  %136 = vmatpush.msra.mxu0 %v23
  %137 = vmatpush.msra.mxu0 %v22
  %138 = vmatpush.msra.mxu0 %v21
  %139 = vmatpush.msra.mxu0 %v20
  %140 = vmatpush.msra.mxu0 %v19
  %141 = vmatpush.msra.mxu0 %v18
  %142 = vmatpush.msra.mxu0 %v17
  %143 = vmatpush.msra.mxu0 %v16
  %144 = vmatpush.msra.mxu0 %v15
  %145 = vmatpush.msra.mxu0 %v14
  %146 = vmatmul.f32.gmra.mxu0 %v122
  %v147 = vpop.f32.mrf.mxu0
  %v148 = vadd.f32 0.0, %v147
  %149 = vmatmul.f32.gmra.mxu0 %v123
  %v150 = vpop.f32.mrf.mxu0
  %v151 = vadd.f32 0.0, %v150
  %152 = vmatmul.f32.gmra.mxu0 %v124
  %v153 = vpop.f32.mrf.mxu0
  %v154 = vadd.f32 0.0, %v153
  %155 = vmatmul.f32.gmra.mxu0 %v125
  %v156 = vpop.f32.mrf.mxu0
  %v157 = vadd.f32 0.0, %v156
  %158 = vmatmul.f32.gmra.mxu0 %v126
  %v159 = vpop.f32.mrf.mxu0
  %v160 = vadd.f32 0.0, %v159
  %161 = vmatmul.f32.gmra.mxu0 %v127
  %v162 = vpop.f32.mrf.mxu0
  %v163 = vadd.f32 0.0, %v162
  %164 = vmatmul.f32.gmra.mxu0 %v128
  %v165 = vpop.f32.mrf.mxu0
  %v166 = vadd.f32 0.0, %v165
  %167 = vmatmul.f32.gmra.mxu0 %v129
  %v168 = vpop.f32.mrf.mxu0
  %v169 = vadd.f32 0.0, %v168
  %170 = vdwg.mxu0
  %v171 = vld [vmem:[%s1] sm:$0xff]
  %v172 = vld [vmem:[%s1 + $0x8] sm:$0xff]
  %v173 = vld [vmem:[%s1 + $0x10] sm:$0xff]
  %v174 = vld [vmem:[%s1 + $0x18] sm:$0xff]
  %v175 = vld [vmem:[%s1 + $0x20] sm:$0xff]
  %v176 = vld [vmem:[%s1 + $0x28] sm:$0xff]
  %v177 = vld [vmem:[%s1 + $0x30] sm:$0xff]
  %v178 = vld [vmem:[%s1 + $0x38] sm:$0xff]
  %v179 = vld [vmem:[%s1 + $0x40] sm:$0xff]
  %v180 = vld [vmem:[%s1 + $0x48] sm:$0xff]
  %v181 = vld [vmem:[%s1 + $0x50] sm:$0xff]
  %v182 = vld [vmem:[%s1 + $0x58] sm:$0xff]
  %v183 = vld [vmem:[%s1 + $0x60] sm:$0xff]
  %v184 = vld [vmem:[%s1 + $0x68] sm:$0xff]
  %v185 = vld [vmem:[%s1 + $0x70] sm:$0xff]
  %v186 = vld [vmem:[%s1 + $0x78] sm:$0xff]
  %v187 = vld [vmem:[%s1 + $0x80] sm:$0xff]
  %v188 = vld [vmem:[%s1 + $0x88] sm:$0xff]
  %v189 = vld [vmem:[%s1 + $0x90] sm:$0xff]
  %v190 = vld [vmem:[%s1 + $0x98] sm:$0xff]
  %v191 = vld [vmem:[%s1 + $0xa0] sm:$0xff]
  %v192 = vld [vmem:[%s1 + $0xa8] sm:$0xff]
  %v193 = vld [vmem:[%s1 + $0xb0] sm:$0xff]
  %v194 = vld [vmem:[%s1 + $0xb8] sm:$0xff]
  %v195 = vld [vmem:[%s1 + $0xc0] sm:$0xff]
  %v196 = vld [vmem:[%s1 + $0xc8] sm:$0xff]
  %v197 = vld [vmem:[%s1 + $0xd0] sm:$0xff]
  %v198 = vld [vmem:[%s1 + $0xd8] sm:$0xff]
  %v199 = vld [vmem:[%s1 + $0xe0] sm:$0xff]
  %v200 = vld [vmem:[%s1 + $0xe8] sm:$0xff]
  %v201 = vld [vmem:[%s1 + $0xf0] sm:$0xff]
  %v202 = vld [vmem:[%s1 + $0xf8] sm:$0xff]
  %vm203 = vcmask 392192
  %v204 = vsel %vm203, %v171, 0.0
  %v205 = vsel %vm203, %v172, 0.0
  %v206 = vadd.f32 %v204, %v205
  %v207 = vrot.slane %v206, 4
  %v208 = vadd.f32 %v206, %v207
  %v209 = vrot.slane %v208, 2
  %v210 = vadd.f32 %v208, %v209
  %v211 = vrot.slane %v210, 1
  %v212 = vadd.f32 %v210, %v211
  %v213 = vsel %vm203, %v173, 0.0
  %v214 = vsel %vm203, %v174, 0.0
  %v215 = vadd.f32 %v213, %v214
  %v216 = vrot.slane %v215, 4
  %v217 = vadd.f32 %v215, %v216
  %v218 = vrot.slane %v217, 2
  %v219 = vadd.f32 %v217, %v218
  %v220 = vrot.slane %v219, 1
  %v221 = vadd.f32 %v219, %v220
  %v222 = vsel %vm203, %v175, 0.0
  %v223 = vsel %vm203, %v176, 0.0
  %v224 = vadd.f32 %v222, %v223
  %v225 = vrot.slane %v224, 4
  %v226 = vadd.f32 %v224, %v225
  %v227 = vrot.slane %v226, 2
  %v228 = vadd.f32 %v226, %v227
  %v229 = vrot.slane %v228, 1
  %v230 = vadd.f32 %v228, %v229
  %v231 = vsel %vm203, %v177, 0.0
  %v232 = vsel %vm203, %v178, 0.0
  %v233 = vadd.f32 %v231, %v232
  %v234 = vrot.slane %v233, 4
  %v235 = vadd.f32 %v233, %v234
  %v236 = vrot.slane %v235, 2
  %v237 = vadd.f32 %v235, %v236
  %v238 = vrot.slane %v237, 1
  %v239 = vadd.f32 %v237, %v238
  %v240 = vsel %vm203, %v179, 0.0
  %v241 = vsel %vm203, %v180, 0.0
  %v242 = vadd.f32 %v240, %v241
  %v243 = vrot.slane %v242, 4
  %v244 = vadd.f32 %v242, %v243
  %v245 = vrot.slane %v244, 2
  %v246 = vadd.f32 %v244, %v245
  %v247 = vrot.slane %v246, 1
  %v248 = vadd.f32 %v246, %v247
  %v249 = vsel %vm203, %v181, 0.0
  %v250 = vsel %vm203, %v182, 0.0
  %v251 = vadd.f32 %v249, %v250
  %v252 = vrot.slane %v251, 4
  %v253 = vadd.f32 %v251, %v252
  %v254 = vrot.slane %v253, 2
  %v255 = vadd.f32 %v253, %v254
  %v256 = vrot.slane %v255, 1
  %v257 = vadd.f32 %v255, %v256
  %v258 = vsel %vm203, %v183, 0.0
  %v259 = vsel %vm203, %v184, 0.0
  %v260 = vadd.f32 %v258, %v259
  %v261 = vrot.slane %v260, 4
  %v262 = vadd.f32 %v260, %v261
  %v263 = vrot.slane %v262, 2
  %v264 = vadd.f32 %v262, %v263
  %v265 = vrot.slane %v264, 1
  %v266 = vadd.f32 %v264, %v265
  %v267 = vsel %vm203, %v185, 0.0
  %v268 = vsel %vm203, %v186, 0.0
  %v269 = vadd.f32 %v267, %v268
  %v270 = vrot.slane %v269, 4
  %v271 = vadd.f32 %v269, %v270
  %v272 = vrot.slane %v271, 2
  %v273 = vadd.f32 %v271, %v272
  %v274 = vrot.slane %v273, 1
  %v275 = vadd.f32 %v273, %v274
  %v276 = vsel %vm203, %v187, 0.0
  %v277 = vsel %vm203, %v188, 0.0
  %v278 = vadd.f32 %v276, %v277
  %v279 = vrot.slane %v278, 4
  %v280 = vadd.f32 %v278, %v279
  %v281 = vrot.slane %v280, 2
  %v282 = vadd.f32 %v280, %v281
  %v283 = vrot.slane %v282, 1
  %v284 = vadd.f32 %v282, %v283
  %v285 = vsel %vm203, %v189, 0.0
  %v286 = vsel %vm203, %v190, 0.0
  %v287 = vadd.f32 %v285, %v286
  %v288 = vrot.slane %v287, 4
  %v289 = vadd.f32 %v287, %v288
  %v290 = vrot.slane %v289, 2
  %v291 = vadd.f32 %v289, %v290
  %v292 = vrot.slane %v291, 1
  %v293 = vadd.f32 %v291, %v292
  %v294 = vsel %vm203, %v191, 0.0
  %v295 = vsel %vm203, %v192, 0.0
  %v296 = vadd.f32 %v294, %v295
  %v297 = vrot.slane %v296, 4
  %v298 = vadd.f32 %v296, %v297
  %v299 = vrot.slane %v298, 2
  %v300 = vadd.f32 %v298, %v299
  %v301 = vrot.slane %v300, 1
  %v302 = vadd.f32 %v300, %v301
  %v303 = vsel %vm203, %v193, 0.0
  %v304 = vsel %vm203, %v194, 0.0
  %v305 = vadd.f32 %v303, %v304
  %v306 = vrot.slane %v305, 4
  %v307 = vadd.f32 %v305, %v306
  %v308 = vrot.slane %v307, 2
  %v309 = vadd.f32 %v307, %v308
  %v310 = vrot.slane %v309, 1
  %v311 = vadd.f32 %v309, %v310
  %v312 = vsel %vm203, %v195, 0.0
  %v313 = vsel %vm203, %v196, 0.0
  %v314 = vadd.f32 %v312, %v313
  %v315 = vrot.slane %v314, 4
  %v316 = vadd.f32 %v314, %v315
  %v317 = vrot.slane %v316, 2
  %v318 = vadd.f32 %v316, %v317
  %v319 = vrot.slane %v318, 1
  %v320 = vadd.f32 %v318, %v319
  %v321 = vsel %vm203, %v197, 0.0
  %v322 = vsel %vm203, %v198, 0.0
  %v323 = vadd.f32 %v321, %v322
  %v324 = vrot.slane %v323, 4
  %v325 = vadd.f32 %v323, %v324
  %v326 = vrot.slane %v325, 2
  %v327 = vadd.f32 %v325, %v326
  %v328 = vrot.slane %v327, 1
  %v329 = vadd.f32 %v327, %v328
  %v330 = vsel %vm203, %v199, 0.0
  %v331 = vsel %vm203, %v200, 0.0
  %v332 = vadd.f32 %v330, %v331
  %v333 = vrot.slane %v332, 4
  %v334 = vadd.f32 %v332, %v333
  %v335 = vrot.slane %v334, 2
  %v336 = vadd.f32 %v334, %v335
  %v337 = vrot.slane %v336, 1
  %v338 = vadd.f32 %v336, %v337
  %v339 = vsel %vm203, %v201, 0.0
  %v340 = vsel %vm203, %v202, 0.0
  %v341 = vadd.f32 %v339, %v340
  %v342 = vrot.slane %v341, 4
  %v343 = vadd.f32 %v341, %v342
  %v344 = vrot.slane %v343, 2
  %v345 = vadd.f32 %v343, %v344
  %v346 = vrot.slane %v345, 1
  %v347 = vadd.f32 %v345, %v346
  %vm356 = vcmask 1041409
  %v357 = vsel %vm356, %v293, %v284
  %vm358 = vcmask 1042434
  %v359 = vsel %vm358, %v302, %v357
  %vm360 = vcmask 1043459
  %v361 = vsel %vm360, %v311, %v359
  %vm362 = vcmask 1044484
  %v363 = vsel %vm362, %v320, %v361
  %vm364 = vcmask 1045509
  %v365 = vsel %vm364, %v329, %v363
  %vm366 = vcmask 1046534
  %v367 = vsel %vm366, %v338, %v365
  %vm368 = vcmask 1047559
  %v369 = vsel %vm368, %v347, %v367
  %v370 = vsel %vm203, %v369, 0
  %372 = vmatpush.msra.mxu0 0.0
  %373 = vmatpush.msra.mxu0 0.0
  %374 = vmatpush.msra.mxu0 0.0
  %375 = vmatpush.msra.mxu0 0.0
  %376 = vmatpush.msra.mxu0 0.0
  %377 = vmatpush.msra.mxu0 0.0
  %378 = vmatpush.msra.mxu0 0.0
  %379 = vmatpush.msra.mxu0 0.0
  %380 = vmatpush.msra.mxu0 0.0
  %381 = vmatpush.msra.mxu0 0.0
  %382 = vmatpush.msra.mxu0 %v59
  %383 = vmatpush.msra.mxu0 %v58
  %384 = vmatpush.msra.mxu0 %v57
  %385 = vmatpush.msra.mxu0 %v56
  %386 = vmatpush.msra.mxu0 %v55
  %387 = vmatpush.msra.mxu0 %v54
  %388 = vmatmul.f32.gmra.mxu0 %v370
  %v389 = vpop.f32.mrf.mxu0
  %v390 = vadd.f32 0.0, %v389
  %391 = vdwg.mxu0
  %v400 = vsel %vm356, %v221, %v212
  %v401 = vsel %vm358, %v230, %v400
  %v402 = vsel %vm360, %v239, %v401
  %v403 = vsel %vm362, %v248, %v402
  %v404 = vsel %vm364, %v257, %v403
  %v405 = vsel %vm366, %v266, %v404
  %v406 = vsel %vm368, %v275, %v405
  %v407 = vsel %vm203, %v406, 0
  %409 = vmatpush.msra.mxu0 0.0
  %410 = vmatpush.msra.mxu0 0.0
  %411 = vmatpush.msra.mxu0 0.0
  %412 = vmatpush.msra.mxu0 0.0
  %413 = vmatpush.msra.mxu0 0.0
  %414 = vmatpush.msra.mxu0 0.0
  %415 = vmatpush.msra.mxu0 0.0
  %416 = vmatpush.msra.mxu0 0.0
  %417 = vmatpush.msra.mxu0 0.0
  %418 = vmatpush.msra.mxu0 0.0
  %419 = vmatpush.msra.mxu0 %v53
  %420 = vmatpush.msra.mxu0 %v52
  %421 = vmatpush.msra.mxu0 %v51
  %422 = vmatpush.msra.mxu0 %v50
  %423 = vmatpush.msra.mxu0 %v49
  %424 = vmatpush.msra.mxu0 %v48
  %425 = vmatmul.f32.gmra.mxu0 %v407
  %v426 = vpop.f32.mrf.mxu0
  %v427 = vadd.f32 %v390, %v426
  %428 = vdwg.mxu0
  %v429 = vperm.slane %v70, 0
  %v430 = vadd.f32 %v427, %v429
  %v431 = vperm.slane %v68, 0
  %vm432 = vcmask 261120
  %v434 = vsel %vm432, %v148, 0
  %v437 = vsel %vm432, %v151, 0
  %v440 = vsel %vm432, %v154, 0
  %v443 = vsel %vm432, %v157, 0
  %v446 = vsel %vm432, %v160, 0
  %v449 = vsel %vm432, %v163, 0
  %v452 = vsel %vm432, %v166, 0
  %v455 = vsel %vm432, %v169, 0
  %457 = vmatpush.msra.mxu0 0.0
  %458 = vmatpush.msra.mxu0 0.0
  %459 = vmatpush.msra.mxu0 0.0
  %460 = vmatpush.msra.mxu0 0.0
  %461 = vmatpush.msra.mxu0 0.0
  %462 = vmatpush.msra.mxu0 0.0
  %463 = vmatpush.msra.mxu0 0.0
  %464 = vmatpush.msra.mxu0 0.0
  %465 = vmatpush.msra.mxu0 0.0
  %466 = vmatpush.msra.mxu0 0.0
  %467 = vmatpush.msra.mxu0 0.0
  %468 = vmatpush.msra.mxu0 0.0
  %469 = vmatpush.msra.mxu0 %v33
  %470 = vmatpush.msra.mxu0 %v32
  %471 = vmatpush.msra.mxu0 %v31
  %472 = vmatpush.msra.mxu0 %v30
  %473 = vmatmul.f32.gmra.mxu0 %v434
  %v474 = vpop.f32.mrf.mxu0
  %v475 = vadd.f32 %v431, %v474
  %476 = vmatmul.f32.gmra.mxu0 %v437
  %v477 = vpop.f32.mrf.mxu0
  %v478 = vadd.f32 %v431, %v477
  %479 = vmatmul.f32.gmra.mxu0 %v440
  %v480 = vpop.f32.mrf.mxu0
  %v481 = vadd.f32 %v431, %v480
  %482 = vmatmul.f32.gmra.mxu0 %v443
  %v483 = vpop.f32.mrf.mxu0
  %v484 = vadd.f32 %v431, %v483
  %485 = vmatmul.f32.gmra.mxu0 %v446
  %v486 = vpop.f32.mrf.mxu0
  %v487 = vadd.f32 %v431, %v486
  %488 = vmatmul.f32.gmra.mxu0 %v449
  %v489 = vpop.f32.mrf.mxu0
  %v490 = vadd.f32 %v431, %v489
  %491 = vmatmul.f32.gmra.mxu0 %v452
  %v492 = vpop.f32.mrf.mxu0
  %v493 = vadd.f32 %v431, %v492
  %494 = vmatmul.f32.gmra.mxu0 %v455
  %v495 = vpop.f32.mrf.mxu0
  %v496 = vadd.f32 %v431, %v495
  %497 = vdwg.mxu0
  %v498 = vxor.u32 %v475, 2147483648
  %v499 = vmul.f32 %v498, 1.442695
  %v500 = vpow.pop %v499
  %v501 = vadd.f32 %v500, 1.0
  %v502 = vrcp.pop %v501
  %v503 = vmul.f32 %v501, %v502
  %v504 = vsub.f32 1.0, %v503
  %v505 = vmul.f32 %v502, %v504
  %v506 = vadd.f32 %v502, %v505
  %vm507 = vweird.f32 %v501
  %vm508 = vweird.f32 %v502
  %vm509 = vmor %vm507, %vm508
  %v510 = vsel %vm509, %v502, %v506
  %v511 = vand.u32 2147483647, %v501
  %vm512 = vcmp.eq.f32.partialorder %v511, 8.507059e+37
  %v513 = vand.u32 %v501, 2147483648
  %v514 = vor.u32 1.1754944e-38, %v513
  %v515 = vsel %vm512, %v514, %v510
  %v516 = vmul.f32 1.0, %v515
  %v517 = vtanh.pop %v475
  %519 = vrot.lane.b32.xlu0 %v517, 80
  %v520 = vpop.permute.xlu0 %519
  %v522 = vmul.f32 %v516, %v520
  %v523 = vtanh.pop %v522
  %525 = vrot.lane.b32.xlu0 %v523, 32
  %v526 = vpop.permute.xlu0 %525
  %v528 = vmul.f32 %v516, %v526
  %530 = vrot.lane.b32.xlu0 %v528, 96
  %v531 = vpop.permute.xlu0 %530
  %vm532 = vcmask 130048
  %v533 = vsel %vm532, %v531, 0
  %535 = vmatpush.msra.mxu0 0.0
  %536 = vmatpush.msra.mxu0 0.0
  %537 = vmatpush.msra.mxu0 0.0
  %538 = vmatpush.msra.mxu0 0.0
  %539 = vmatpush.msra.mxu0 0.0
  %540 = vmatpush.msra.mxu0 0.0
  %541 = vmatpush.msra.mxu0 0.0
  %542 = vmatpush.msra.mxu0 0.0
  %543 = vmatpush.msra.mxu0 0.0
  %544 = vmatpush.msra.mxu0 0.0
  %545 = vmatpush.msra.mxu0 0.0
  %546 = vmatpush.msra.mxu0 0.0
  %547 = vmatpush.msra.mxu0 0.0
  %548 = vmatpush.msra.mxu0 0.0
  %549 = vmatpush.msra.mxu0 %v39
  %550 = vmatpush.msra.mxu0 %v38
  %551 = vmatmul.f32.gmra.mxu0 %v533
  %v552 = vpop.f32.mrf.mxu0
  %v553 = vadd.f32 0.0, %v552
  %554 = vdwg.mxu0
  %v555 = vadd.f32 %v478, %v553
  %v556 = vxor.u32 %v555, 2147483648
  %v557 = vmul.f32 %v556, 1.442695
  %v558 = vpow.pop %v557
  %v559 = vadd.f32 %v558, 1.0
  %v560 = vrcp.pop %v559
  %v561 = vmul.f32 %v559, %v560
  %v562 = vsub.f32 1.0, %v561
  %v563 = vmul.f32 %v560, %v562
  %v564 = vadd.f32 %v560, %v563
  %vm565 = vweird.f32 %v559
  %vm566 = vweird.f32 %v560
  %vm567 = vmor %vm565, %vm566
  %v568 = vsel %vm567, %v560, %v564
  %v569 = vand.u32 2147483647, %v559
  %vm570 = vcmp.eq.f32.partialorder %v569, 8.507059e+37
  %v571 = vand.u32 %v559, 2147483648
  %v572 = vor.u32 1.1754944e-38, %v571
  %v573 = vsel %vm570, %v572, %v568
  %v574 = vmul.f32 1.0, %v573
  %v575 = vtanh.pop %v555
  %577 = vrot.lane.b32.xlu0 %v522, 16
  %v578 = vpop.permute.xlu0 %577
  %v580 = vmul.f32 %v574, %v578
  %582 = vrot.lane.b32.xlu0 %v575, 80
  %v583 = vpop.permute.xlu0 %582
  %v585 = vmul.f32 %v574, %v583
  %587 = vrot.lane.b32.xlu0 %v585, 16
  %v588 = vpop.permute.xlu0 %587
  %v590 = vadd.f32 %v580, %v588
  %v591 = vtanh.pop %v590
  %593 = vrot.lane.b32.xlu0 %v591, 16
  %v594 = vpop.permute.xlu0 %593
  %v596 = vmul.f32 %v574, %v594
  %598 = vrot.lane.b32.xlu0 %v596, 96
  %v599 = vpop.permute.xlu0 %598
  %v600 = vsel %vm532, %v599, 0
  %602 = vmatpush.msra.mxu0 0.0
  %603 = vmatpush.msra.mxu0 0.0
  %604 = vmatpush.msra.mxu0 0.0
  %605 = vmatpush.msra.mxu0 0.0
  %606 = vmatpush.msra.mxu0 0.0
  %607 = vmatpush.msra.mxu0 0.0
  %608 = vmatpush.msra.mxu0 0.0
  %609 = vmatpush.msra.mxu0 0.0
  %610 = vmatpush.msra.mxu0 0.0
  %611 = vmatpush.msra.mxu0 0.0
  %612 = vmatpush.msra.mxu0 0.0
  %613 = vmatpush.msra.mxu0 0.0
  %614 = vmatpush.msra.mxu0 0.0
  %615 = vmatpush.msra.mxu0 0.0
  %616 = vmatpush.msra.mxu0 %v39
  %617 = vmatpush.msra.mxu0 %v38
  %618 = vmatmul.f32.gmra.mxu0 %v600
  %v619 = vpop.f32.mrf.mxu0
  %v620 = vadd.f32 0.0, %v619
  %621 = vdwg.mxu0
  %v622 = vadd.f32 %v481, %v620
  %v623 = vxor.u32 %v622, 2147483648
  %v624 = vmul.f32 %v623, 1.442695
  %v625 = vpow.pop %v624
  %v626 = vadd.f32 %v625, 1.0
  %v627 = vrcp.pop %v626
  %v628 = vmul.f32 %v626, %v627
  %v629 = vsub.f32 1.0, %v628
  %v630 = vmul.f32 %v627, %v629
  %v631 = vadd.f32 %v627, %v630
  %vm632 = vweird.f32 %v626
  %vm633 = vweird.f32 %v627
  %vm634 = vmor %vm632, %vm633
  %v635 = vsel %vm634, %v627, %v631
  %v636 = vand.u32 2147483647, %v626
  %vm637 = vcmp.eq.f32.partialorder %v636, 8.507059e+37
  %v638 = vand.u32 %v626, 2147483648
  %v639 = vor.u32 1.1754944e-38, %v638
  %v640 = vsel %vm637, %v639, %v635
  %v641 = vmul.f32 1.0, %v640
  %v642 = vtanh.pop %v622
  %v643 = vmul.f32 %v641, %v590
  %645 = vrot.lane.b32.xlu0 %v642, 80
  %v646 = vpop.permute.xlu0 %645
  %v648 = vmul.f32 %v641, %v646
  %650 = vrot.lane.b32.xlu0 %v648, 16
  %v651 = vpop.permute.xlu0 %650
  %v653 = vadd.f32 %v643, %v651
  %v654 = vtanh.pop %v653
  %656 = vrot.lane.b32.xlu0 %v654, 16
  %v657 = vpop.permute.xlu0 %656
  %v659 = vmul.f32 %v641, %v657
  %661 = vrot.lane.b32.xlu0 %v659, 96
  %v662 = vpop.permute.xlu0 %661
  %v663 = vsel %vm532, %v662, 0
  %665 = vmatpush.msra.mxu0 0.0
  %666 = vmatpush.msra.mxu0 0.0
  %667 = vmatpush.msra.mxu0 0.0
  %668 = vmatpush.msra.mxu0 0.0
  %669 = vmatpush.msra.mxu0 0.0
  %670 = vmatpush.msra.mxu0 0.0
  %671 = vmatpush.msra.mxu0 0.0
  %672 = vmatpush.msra.mxu0 0.0
  %673 = vmatpush.msra.mxu0 0.0
  %674 = vmatpush.msra.mxu0 0.0
  %675 = vmatpush.msra.mxu0 0.0
  %676 = vmatpush.msra.mxu0 0.0
  %677 = vmatpush.msra.mxu0 0.0
  %678 = vmatpush.msra.mxu0 0.0
  %679 = vmatpush.msra.mxu0 %v39
  %680 = vmatpush.msra.mxu0 %v38
  %681 = vmatmul.f32.gmra.mxu0 %v663
  %v682 = vpop.f32.mrf.mxu0
  %v683 = vadd.f32 0.0, %v682
  %684 = vdwg.mxu0
  %v685 = vadd.f32 %v484, %v683
  %v686 = vxor.u32 %v685, 2147483648
  %v687 = vmul.f32 %v686, 1.442695
  %v688 = vpow.pop %v687
  %v689 = vadd.f32 %v688, 1.0
  %v690 = vrcp.pop %v689
  %v691 = vmul.f32 %v689, %v690
  %v692 = vsub.f32 1.0, %v691
  %v693 = vmul.f32 %v690, %v692
  %v694 = vadd.f32 %v690, %v693
  %vm695 = vweird.f32 %v689
  %vm696 = vweird.f32 %v690
  %vm697 = vmor %vm695, %vm696
  %v698 = vsel %vm697, %v690, %v694
  %v699 = vand.u32 2147483647, %v689
  %vm700 = vcmp.eq.f32.partialorder %v699, 8.507059e+37
  %v701 = vand.u32 %v689, 2147483648
  %v702 = vor.u32 1.1754944e-38, %v701
  %v703 = vsel %vm700, %v702, %v698
  %v704 = vmul.f32 1.0, %v703
  %v705 = vtanh.pop %v685
  %v706 = vmul.f32 %v704, %v653
  %708 = vrot.lane.b32.xlu0 %v705, 80
  %v709 = vpop.permute.xlu0 %708
  %v711 = vmul.f32 %v704, %v709
  %713 = vrot.lane.b32.xlu0 %v711, 16
  %v714 = vpop.permute.xlu0 %713
  %v716 = vadd.f32 %v706, %v714
  %v717 = vtanh.pop %v716
  %719 = vrot.lane.b32.xlu0 %v717, 16
  %v720 = vpop.permute.xlu0 %719
  %v722 = vmul.f32 %v704, %v720
  %724 = vrot.lane.b32.xlu0 %v722, 96
  %v725 = vpop.permute.xlu0 %724
  %v726 = vsel %vm532, %v725, 0
  %728 = vmatpush.msra.mxu0 0.0
  %729 = vmatpush.msra.mxu0 0.0
  %730 = vmatpush.msra.mxu0 0.0
  %731 = vmatpush.msra.mxu0 0.0
  %732 = vmatpush.msra.mxu0 0.0
  %733 = vmatpush.msra.mxu0 0.0
  %734 = vmatpush.msra.mxu0 0.0
  %735 = vmatpush.msra.mxu0 0.0
  %736 = vmatpush.msra.mxu0 0.0
  %737 = vmatpush.msra.mxu0 0.0
  %738 = vmatpush.msra.mxu0 0.0
  %739 = vmatpush.msra.mxu0 0.0
  %740 = vmatpush.msra.mxu0 0.0
  %741 = vmatpush.msra.mxu0 0.0
  %742 = vmatpush.msra.mxu0 %v39
  %743 = vmatpush.msra.mxu0 %v38
  %744 = vmatmul.f32.gmra.mxu0 %v726
  %v745 = vpop.f32.mrf.mxu0
  %v746 = vadd.f32 0.0, %v745
  %747 = vdwg.mxu0
  %v748 = vadd.f32 %v487, %v746
  %v749 = vxor.u32 %v748, 2147483648
  %v750 = vmul.f32 %v749, 1.442695
  %v751 = vpow.pop %v750
  %v752 = vadd.f32 %v751, 1.0
  %v753 = vrcp.pop %v752
  %v754 = vmul.f32 %v752, %v753
  %v755 = vsub.f32 1.0, %v754
  %v756 = vmul.f32 %v753, %v755
  %v757 = vadd.f32 %v753, %v756
  %vm758 = vweird.f32 %v752
  %vm759 = vweird.f32 %v753
  %vm760 = vmor %vm758, %vm759
  %v761 = vsel %vm760, %v753, %v757
  %v762 = vand.u32 2147483647, %v752
  %vm763 = vcmp.eq.f32.partialorder %v762, 8.507059e+37
  %v764 = vand.u32 %v752, 2147483648
  %v765 = vor.u32 1.1754944e-38, %v764
  %v766 = vsel %vm763, %v765, %v761
  %v767 = vmul.f32 1.0, %v766
  %v768 = vtanh.pop %v748
  %v769 = vmul.f32 %v767, %v716
  %771 = vrot.lane.b32.xlu0 %v768, 80
  %v772 = vpop.permute.xlu0 %771
  %v774 = vmul.f32 %v767, %v772
  %776 = vrot.lane.b32.xlu0 %v774, 16
  %v777 = vpop.permute.xlu0 %776
  %v779 = vadd.f32 %v769, %v777
  %v780 = vtanh.pop %v779
  %782 = vrot.lane.b32.xlu0 %v780, 16
  %v783 = vpop.permute.xlu0 %782
  %v785 = vmul.f32 %v767, %v783
  %787 = vrot.lane.b32.xlu0 %v785, 96
  %v788 = vpop.permute.xlu0 %787
  %v789 = vsel %vm532, %v788, 0
  %791 = vmatpush.msra.mxu0 0.0
  %792 = vmatpush.msra.mxu0 0.0
  %793 = vmatpush.msra.mxu0 0.0
  %794 = vmatpush.msra.mxu0 0.0
  %795 = vmatpush.msra.mxu0 0.0
  %796 = vmatpush.msra.mxu0 0.0
  %797 = vmatpush.msra.mxu0 0.0
  %798 = vmatpush.msra.mxu0 0.0
  %799 = vmatpush.msra.mxu0 0.0
  %800 = vmatpush.msra.mxu0 0.0
  %801 = vmatpush.msra.mxu0 0.0
  %802 = vmatpush.msra.mxu0 0.0
  %803 = vmatpush.msra.mxu0 0.0
  %804 = vmatpush.msra.mxu0 0.0
  %805 = vmatpush.msra.mxu0 %v39
  %806 = vmatpush.msra.mxu0 %v38
  %807 = vmatmul.f32.gmra.mxu0 %v789
  %v808 = vpop.f32.mrf.mxu0
  %v809 = vadd.f32 0.0, %v808
  %810 = vdwg.mxu0
  %v811 = vadd.f32 %v490, %v809
  %v812 = vxor.u32 %v811, 2147483648
  %v813 = vmul.f32 %v812, 1.442695
  %v814 = vpow.pop %v813
  %v815 = vadd.f32 %v814, 1.0
  %v816 = vrcp.pop %v815
  %v817 = vmul.f32 %v815, %v816
  %v818 = vsub.f32 1.0, %v817
  %v819 = vmul.f32 %v816, %v818
  %v820 = vadd.f32 %v816, %v819
  %vm821 = vweird.f32 %v815
  %vm822 = vweird.f32 %v816
  %vm823 = vmor %vm821, %vm822
  %v824 = vsel %vm823, %v816, %v820
  %v825 = vand.u32 2147483647, %v815
  %vm826 = vcmp.eq.f32.partialorder %v825, 8.507059e+37
  %v827 = vand.u32 %v815, 2147483648
  %v828 = vor.u32 1.1754944e-38, %v827
  %v829 = vsel %vm826, %v828, %v824
  %v830 = vmul.f32 1.0, %v829
  %v831 = vtanh.pop %v811
  %v832 = vmul.f32 %v830, %v779
  %834 = vrot.lane.b32.xlu0 %v831, 80
  %v835 = vpop.permute.xlu0 %834
  %v837 = vmul.f32 %v830, %v835
  %839 = vrot.lane.b32.xlu0 %v837, 16
  %v840 = vpop.permute.xlu0 %839
  %v842 = vadd.f32 %v832, %v840
  %v843 = vtanh.pop %v842
  %845 = vrot.lane.b32.xlu0 %v843, 16
  %v846 = vpop.permute.xlu0 %845
  %v848 = vmul.f32 %v830, %v846
  %850 = vrot.lane.b32.xlu0 %v848, 96
  %v851 = vpop.permute.xlu0 %850
  %v852 = vsel %vm532, %v851, 0
  %854 = vmatpush.msra.mxu0 0.0
  %855 = vmatpush.msra.mxu0 0.0
  %856 = vmatpush.msra.mxu0 0.0
  %857 = vmatpush.msra.mxu0 0.0
  %858 = vmatpush.msra.mxu0 0.0
  %859 = vmatpush.msra.mxu0 0.0
  %860 = vmatpush.msra.mxu0 0.0
  %861 = vmatpush.msra.mxu0 0.0
  %862 = vmatpush.msra.mxu0 0.0
  %863 = vmatpush.msra.mxu0 0.0
  %864 = vmatpush.msra.mxu0 0.0
  %865 = vmatpush.msra.mxu0 0.0
  %866 = vmatpush.msra.mxu0 0.0
  %867 = vmatpush.msra.mxu0 0.0
  %868 = vmatpush.msra.mxu0 %v39
  %869 = vmatpush.msra.mxu0 %v38
  %870 = vmatmul.f32.gmra.mxu0 %v852
  %v871 = vpop.f32.mrf.mxu0
  %v872 = vadd.f32 0.0, %v871
  %873 = vdwg.mxu0
  %v874 = vadd.f32 %v493, %v872
  %v875 = vxor.u32 %v874, 2147483648
  %v876 = vmul.f32 %v875, 1.442695
  %v877 = vpow.pop %v876
  %v878 = vadd.f32 %v877, 1.0
  %v879 = vrcp.pop %v878
  %v880 = vmul.f32 %v878, %v879
  %v881 = vsub.f32 1.0, %v880
  %v882 = vmul.f32 %v879, %v881
  %v883 = vadd.f32 %v879, %v882
  %vm884 = vweird.f32 %v878
  %vm885 = vweird.f32 %v879
  %vm886 = vmor %vm884, %vm885
  %v887 = vsel %vm886, %v879, %v883
  %v888 = vand.u32 2147483647, %v878
  %vm889 = vcmp.eq.f32.partialorder %v888, 8.507059e+37
  %v890 = vand.u32 %v878, 2147483648
  %v891 = vor.u32 1.1754944e-38, %v890
  %v892 = vsel %vm889, %v891, %v887
  %v893 = vmul.f32 1.0, %v892
  %v894 = vtanh.pop %v874
  %v895 = vmul.f32 %v893, %v842
  %897 = vrot.lane.b32.xlu0 %v894, 80
  %v898 = vpop.permute.xlu0 %897
  %v900 = vmul.f32 %v893, %v898
  %902 = vrot.lane.b32.xlu0 %v900, 16
  %v903 = vpop.permute.xlu0 %902
  %v905 = vadd.f32 %v895, %v903
  %v906 = vtanh.pop %v905
  %908 = vrot.lane.b32.xlu0 %v906, 16
  %v909 = vpop.permute.xlu0 %908
  %v911 = vmul.f32 %v893, %v909
  %913 = vrot.lane.b32.xlu0 %v911, 96
  %v914 = vpop.permute.xlu0 %913
  %v915 = vsel %vm532, %v914, 0
  %917 = vmatpush.msra.mxu0 0.0
  %918 = vmatpush.msra.mxu0 0.0
  %919 = vmatpush.msra.mxu0 0.0
  %920 = vmatpush.msra.mxu0 0.0
  %921 = vmatpush.msra.mxu0 0.0
  %922 = vmatpush.msra.mxu0 0.0
  %923 = vmatpush.msra.mxu0 0.0
  %924 = vmatpush.msra.mxu0 0.0
  %925 = vmatpush.msra.mxu0 0.0
  %926 = vmatpush.msra.mxu0 0.0
  %927 = vmatpush.msra.mxu0 0.0
  %928 = vmatpush.msra.mxu0 0.0
  %929 = vmatpush.msra.mxu0 0.0
  %930 = vmatpush.msra.mxu0 0.0
  %931 = vmatpush.msra.mxu0 %v39
  %932 = vmatpush.msra.mxu0 %v38
  %933 = vmatmul.f32.gmra.mxu0 %v915
  %v934 = vpop.f32.mrf.mxu0
  %v935 = vadd.f32 0.0, %v934
  %936 = vdwg.mxu0
  %v937 = vadd.f32 %v496, %v935
  %v938 = vxor.u32 %v937, 2147483648
  %v939 = vmul.f32 %v938, 1.442695
  %v940 = vpow.pop %v939
  %v941 = vadd.f32 %v940, 1.0
  %v942 = vrcp.pop %v941
  %v943 = vmul.f32 %v941, %v942
  %v944 = vsub.f32 1.0, %v943
  %v945 = vmul.f32 %v942, %v944
  %v946 = vadd.f32 %v942, %v945
  %vm947 = vweird.f32 %v941
  %vm948 = vweird.f32 %v942
  %vm949 = vmor %vm947, %vm948
  %v950 = vsel %vm949, %v942, %v946
  %v951 = vand.u32 2147483647, %v941
  %vm952 = vcmp.eq.f32.partialorder %v951, 8.507059e+37
  %v953 = vand.u32 %v941, 2147483648
  %v954 = vor.u32 1.1754944e-38, %v953
  %v955 = vsel %vm952, %v954, %v950
  %v956 = vmul.f32 1.0, %v955
  %v957 = vtanh.pop %v937
  %v958 = vmul.f32 %v956, %v905
  %960 = vrot.lane.b32.xlu0 %v957, 80
  %v961 = vpop.permute.xlu0 %960
  %v963 = vmul.f32 %v956, %v961
  %965 = vrot.lane.b32.xlu0 %v963, 16
  %v966 = vpop.permute.xlu0 %965
  %v968 = vadd.f32 %v958, %v966
  %v969 = vtanh.pop %v968
  %971 = vrot.lane.b32.xlu0 %v969, 16
  %v972 = vpop.permute.xlu0 %971
  %v974 = vmul.f32 %v956, %v972
  %v975 = vxor.u32 %v496, 2147483648
  %v976 = vmul.f32 %v975, 1.442695
  %v977 = vpow.pop %v976
  %v978 = vadd.f32 %v977, 1.0
  %v979 = vrcp.pop %v978
  %v980 = vmul.f32 %v978, %v979
  %v981 = vsub.f32 1.0, %v980
  %v982 = vmul.f32 %v979, %v981
  %v983 = vadd.f32 %v979, %v982
  %vm984 = vweird.f32 %v978
  %vm985 = vweird.f32 %v979
  %vm986 = vmor %vm984, %vm985
  %v987 = vsel %vm986, %v979, %v983
  %v988 = vand.u32 2147483647, %v978
  %vm989 = vcmp.eq.f32.partialorder %v988, 8.507059e+37
  %v990 = vand.u32 %v978, 2147483648
  %v991 = vor.u32 1.1754944e-38, %v990
  %v992 = vsel %vm989, %v991, %v987
  %v993 = vmul.f32 1.0, %v992
  %v994 = vtanh.pop %v496
  %996 = vrot.lane.b32.xlu0 %v994, 80
  %v997 = vpop.permute.xlu0 %996
  %v999 = vmul.f32 %v993, %v997
  %v1000 = vtanh.pop %v999
  %1002 = vrot.lane.b32.xlu0 %v1000, 32
  %v1003 = vpop.permute.xlu0 %1002
  %v1005 = vmul.f32 %v993, %v1003
  %1007 = vrot.lane.b32.xlu0 %v1005, 32
  %v1008 = vpop.permute.xlu0 %1007
  %v1009 = vsel %vm532, %v1008, 0
  %1011 = vmatpush.msra.mxu0 0.0
  %1012 = vmatpush.msra.mxu0 0.0
  %1013 = vmatpush.msra.mxu0 0.0
  %1014 = vmatpush.msra.mxu0 0.0
  %1015 = vmatpush.msra.mxu0 0.0
  %1016 = vmatpush.msra.mxu0 0.0
  %1017 = vmatpush.msra.mxu0 0.0
  %1018 = vmatpush.msra.mxu0 0.0
  %1019 = vmatpush.msra.mxu0 0.0
  %1020 = vmatpush.msra.mxu0 0.0
  %1021 = vmatpush.msra.mxu0 0.0
  %1022 = vmatpush.msra.mxu0 0.0
  %1023 = vmatpush.msra.mxu0 0.0
  %1024 = vmatpush.msra.mxu0 0.0
  %1025 = vmatpush.msra.mxu0 %v41
  %1026 = vmatpush.msra.mxu0 %v40
  %1027 = vmatmul.f32.gmra.mxu0 %v1009
  %v1028 = vpop.f32.mrf.mxu0
  %v1029 = vadd.f32 0.0, %v1028
  %1030 = vdwg.mxu0
  %1032 = vrot.lane.b32.xlu0 %v1029, 64
  %v1033 = vpop.permute.xlu0 %1032
  %v1035 = vadd.f32 %v493, %v1033
  %v1036 = vxor.u32 %v1035, 2147483648
  %v1037 = vmul.f32 %v1036, 1.442695
  %v1038 = vpow.pop %v1037
  %v1039 = vadd.f32 %v1038, 1.0
  %v1040 = vrcp.pop %v1039
  %v1041 = vmul.f32 %v1039, %v1040
  %v1042 = vsub.f32 1.0, %v1041
  %v1043 = vmul.f32 %v1040, %v1042
  %v1044 = vadd.f32 %v1040, %v1043
  %vm1045 = vweird.f32 %v1039
  %vm1046 = vweird.f32 %v1040
  %vm1047 = vmor %vm1045, %vm1046
  %v1048 = vsel %vm1047, %v1040, %v1044
  %v1049 = vand.u32 2147483647, %v1039
  %vm1050 = vcmp.eq.f32.partialorder %v1049, 8.507059e+37
  %v1051 = vand.u32 %v1039, 2147483648
  %v1052 = vor.u32 1.1754944e-38, %v1051
  %v1053 = vsel %vm1050, %v1052, %v1048
  %v1054 = vmul.f32 1.0, %v1053
  %v1055 = vtanh.pop %v1035
  %1057 = vrot.lane.b32.xlu0 %v999, 16
  %v1058 = vpop.permute.xlu0 %1057
  %v1060 = vmul.f32 %v1054, %v1058
  %1062 = vrot.lane.b32.xlu0 %v1055, 80
  %v1063 = vpop.permute.xlu0 %1062
  %v1065 = vmul.f32 %v1054, %v1063
  %1067 = vrot.lane.b32.xlu0 %v1065, 16
  %v1068 = vpop.permute.xlu0 %1067
  %v1070 = vadd.f32 %v1060, %v1068
  %v1071 = vtanh.pop %v1070
  %1073 = vrot.lane.b32.xlu0 %v1071, 16
  %v1074 = vpop.permute.xlu0 %1073
  %v1076 = vmul.f32 %v1054, %v1074
  %1078 = vrot.lane.b32.xlu0 %v1076, 32
  %v1079 = vpop.permute.xlu0 %1078
  %v1080 = vsel %vm532, %v1079, 0
  %1082 = vmatpush.msra.mxu0 0.0
  %1083 = vmatpush.msra.mxu0 0.0
  %1084 = vmatpush.msra.mxu0 0.0
  %1085 = vmatpush.msra.mxu0 0.0
  %1086 = vmatpush.msra.mxu0 0.0
  %1087 = vmatpush.msra.mxu0 0.0
  %1088 = vmatpush.msra.mxu0 0.0
  %1089 = vmatpush.msra.mxu0 0.0
  %1090 = vmatpush.msra.mxu0 0.0
  %1091 = vmatpush.msra.mxu0 0.0
  %1092 = vmatpush.msra.mxu0 0.0
  %1093 = vmatpush.msra.mxu0 0.0
  %1094 = vmatpush.msra.mxu0 0.0
  %1095 = vmatpush.msra.mxu0 0.0
  %1096 = vmatpush.msra.mxu0 %v41
  %1097 = vmatpush.msra.mxu0 %v40
  %1098 = vmatmul.f32.gmra.mxu0 %v1080
  %v1099 = vpop.f32.mrf.mxu0
  %v1100 = vadd.f32 0.0, %v1099
  %1101 = vdwg.mxu0
  %1103 = vrot.lane.b32.xlu0 %v1100, 64
  %v1104 = vpop.permute.xlu0 %1103
  %v1106 = vadd.f32 %v490, %v1104
  %v1107 = vxor.u32 %v1106, 2147483648
  %v1108 = vmul.f32 %v1107, 1.442695
  %v1109 = vpow.pop %v1108
  %v1110 = vadd.f32 %v1109, 1.0
  %v1111 = vrcp.pop %v1110
  %v1112 = vmul.f32 %v1110, %v1111
  %v1113 = vsub.f32 1.0, %v1112
  %v1114 = vmul.f32 %v1111, %v1113
  %v1115 = vadd.f32 %v1111, %v1114
  %vm1116 = vweird.f32 %v1110
  %vm1117 = vweird.f32 %v1111
  %vm1118 = vmor %vm1116, %vm1117
  %v1119 = vsel %vm1118, %v1111, %v1115
  %v1120 = vand.u32 2147483647, %v1110
  %vm1121 = vcmp.eq.f32.partialorder %v1120, 8.507059e+37
  %v1122 = vand.u32 %v1110, 2147483648
  %v1123 = vor.u32 1.1754944e-38, %v1122
  %v1124 = vsel %vm1121, %v1123, %v1119
  %v1125 = vmul.f32 1.0, %v1124
  %v1126 = vtanh.pop %v1106
  %v1127 = vmul.f32 %v1125, %v1070
  %1129 = vrot.lane.b32.xlu0 %v1126, 80
  %v1130 = vpop.permute.xlu0 %1129
  %v1132 = vmul.f32 %v1125, %v1130
  %1134 = vrot.lane.b32.xlu0 %v1132, 16
  %v1135 = vpop.permute.xlu0 %1134
  %v1137 = vadd.f32 %v1127, %v1135
  %v1138 = vtanh.pop %v1137
  %1140 = vrot.lane.b32.xlu0 %v1138, 16
  %v1141 = vpop.permute.xlu0 %1140
  %v1143 = vmul.f32 %v1125, %v1141
  %1145 = vrot.lane.b32.xlu0 %v1143, 32
  %v1146 = vpop.permute.xlu0 %1145
  %v1147 = vsel %vm532, %v1146, 0
  %1149 = vmatpush.msra.mxu0 0.0
  %1150 = vmatpush.msra.mxu0 0.0
  %1151 = vmatpush.msra.mxu0 0.0
  %1152 = vmatpush.msra.mxu0 0.0
  %1153 = vmatpush.msra.mxu0 0.0
  %1154 = vmatpush.msra.mxu0 0.0
  %1155 = vmatpush.msra.mxu0 0.0
  %1156 = vmatpush.msra.mxu0 0.0
  %1157 = vmatpush.msra.mxu0 0.0
  %1158 = vmatpush.msra.mxu0 0.0
  %1159 = vmatpush.msra.mxu0 0.0
  %1160 = vmatpush.msra.mxu0 0.0
  %1161 = vmatpush.msra.mxu0 0.0
  %1162 = vmatpush.msra.mxu0 0.0
  %1163 = vmatpush.msra.mxu0 %v41
  %1164 = vmatpush.msra.mxu0 %v40
  %1165 = vmatmul.f32.gmra.mxu0 %v1147
  %v1166 = vpop.f32.mrf.mxu0
  %v1167 = vadd.f32 0.0, %v1166
  %1168 = vdwg.mxu0
  %1170 = vrot.lane.b32.xlu0 %v1167, 64
  %v1171 = vpop.permute.xlu0 %1170
  %v1173 = vadd.f32 %v487, %v1171
  %v1174 = vxor.u32 %v1173, 2147483648
  %v1175 = vmul.f32 %v1174, 1.442695
  %v1176 = vpow.pop %v1175
  %v1177 = vadd.f32 %v1176, 1.0
  %v1178 = vrcp.pop %v1177
  %v1179 = vmul.f32 %v1177, %v1178
  %v1180 = vsub.f32 1.0, %v1179
  %v1181 = vmul.f32 %v1178, %v1180
  %v1182 = vadd.f32 %v1178, %v1181
  %vm1183 = vweird.f32 %v1177
  %vm1184 = vweird.f32 %v1178
  %vm1185 = vmor %vm1183, %vm1184
  %v1186 = vsel %vm1185, %v1178, %v1182
  %v1187 = vand.u32 2147483647, %v1177
  %vm1188 = vcmp.eq.f32.partialorder %v1187, 8.507059e+37
  %v1189 = vand.u32 %v1177, 2147483648
  %v1190 = vor.u32 1.1754944e-38, %v1189
  %v1191 = vsel %vm1188, %v1190, %v1186
  %v1192 = vmul.f32 1.0, %v1191
  %v1193 = vtanh.pop %v1173
  %v1194 = vmul.f32 %v1192, %v1137
  %1196 = vrot.lane.b32.xlu0 %v1193, 80
  %v1197 = vpop.permute.xlu0 %1196
  %v1199 = vmul.f32 %v1192, %v1197
  %1201 = vrot.lane.b32.xlu0 %v1199, 16
  %v1202 = vpop.permute.xlu0 %1201
  %v1204 = vadd.f32 %v1194, %v1202
  %v1205 = vtanh.pop %v1204
  %1207 = vrot.lane.b32.xlu0 %v1205, 16
  %v1208 = vpop.permute.xlu0 %1207
  %v1210 = vmul.f32 %v1192, %v1208
  %1212 = vrot.lane.b32.xlu0 %v1210, 32
  %v1213 = vpop.permute.xlu0 %1212
  %v1214 = vsel %vm532, %v1213, 0
  %1216 = vmatpush.msra.mxu0 0.0
  %1217 = vmatpush.msra.mxu0 0.0
  %1218 = vmatpush.msra.mxu0 0.0
  %1219 = vmatpush.msra.mxu0 0.0
  %1220 = vmatpush.msra.mxu0 0.0
  %1221 = vmatpush.msra.mxu0 0.0
  %1222 = vmatpush.msra.mxu0 0.0
  %1223 = vmatpush.msra.mxu0 0.0
  %1224 = vmatpush.msra.mxu0 0.0
  %1225 = vmatpush.msra.mxu0 0.0
  %1226 = vmatpush.msra.mxu0 0.0
  %1227 = vmatpush.msra.mxu0 0.0
  %1228 = vmatpush.msra.mxu0 0.0
  %1229 = vmatpush.msra.mxu0 0.0
  %1230 = vmatpush.msra.mxu0 %v41
  %1231 = vmatpush.msra.mxu0 %v40
  %1232 = vmatmul.f32.gmra.mxu0 %v1214
  %v1233 = vpop.f32.mrf.mxu0
  %v1234 = vadd.f32 0.0, %v1233
  %1235 = vdwg.mxu0
  %1237 = vrot.lane.b32.xlu0 %v1234, 64
  %v1238 = vpop.permute.xlu0 %1237
  %v1240 = vadd.f32 %v484, %v1238
  %v1241 = vxor.u32 %v1240, 2147483648
  %v1242 = vmul.f32 %v1241, 1.442695
  %v1243 = vpow.pop %v1242
  %v1244 = vadd.f32 %v1243, 1.0
  %v1245 = vrcp.pop %v1244
  %v1246 = vmul.f32 %v1244, %v1245
  %v1247 = vsub.f32 1.0, %v1246
  %v1248 = vmul.f32 %v1245, %v1247
  %v1249 = vadd.f32 %v1245, %v1248
  %vm1250 = vweird.f32 %v1244
  %vm1251 = vweird.f32 %v1245
  %vm1252 = vmor %vm1250, %vm1251
  %v1253 = vsel %vm1252, %v1245, %v1249
  %v1254 = vand.u32 2147483647, %v1244
  %vm1255 = vcmp.eq.f32.partialorder %v1254, 8.507059e+37
  %v1256 = vand.u32 %v1244, 2147483648
  %v1257 = vor.u32 1.1754944e-38, %v1256
  %v1258 = vsel %vm1255, %v1257, %v1253
  %v1259 = vmul.f32 1.0, %v1258
  %v1260 = vtanh.pop %v1240
  %v1261 = vmul.f32 %v1259, %v1204
  %1263 = vrot.lane.b32.xlu0 %v1260, 80
  %v1264 = vpop.permute.xlu0 %1263
  %v1266 = vmul.f32 %v1259, %v1264
  %1268 = vrot.lane.b32.xlu0 %v1266, 16
  %v1269 = vpop.permute.xlu0 %1268
  %v1271 = vadd.f32 %v1261, %v1269
  %v1272 = vtanh.pop %v1271
  %1274 = vrot.lane.b32.xlu0 %v1272, 16
  %v1275 = vpop.permute.xlu0 %1274
  %v1277 = vmul.f32 %v1259, %v1275
  %1279 = vrot.lane.b32.xlu0 %v1277, 32
  %v1280 = vpop.permute.xlu0 %1279
  %v1281 = vsel %vm532, %v1280, 0
  %1283 = vmatpush.msra.mxu0 0.0
  %1284 = vmatpush.msra.mxu0 0.0
  %1285 = vmatpush.msra.mxu0 0.0
  %1286 = vmatpush.msra.mxu0 0.0
  %1287 = vmatpush.msra.mxu0 0.0
  %1288 = vmatpush.msra.mxu0 0.0
  %1289 = vmatpush.msra.mxu0 0.0
  %1290 = vmatpush.msra.mxu0 0.0
  %1291 = vmatpush.msra.mxu0 0.0
  %1292 = vmatpush.msra.mxu0 0.0
  %1293 = vmatpush.msra.mxu0 0.0
  %1294 = vmatpush.msra.mxu0 0.0
  %1295 = vmatpush.msra.mxu0 0.0
  %1296 = vmatpush.msra.mxu0 0.0
  %1297 = vmatpush.msra.mxu0 %v41
  %1298 = vmatpush.msra.mxu0 %v40
  %1299 = vmatmul.f32.gmra.mxu0 %v1281
  %v1300 = vpop.f32.mrf.mxu0
  %v1301 = vadd.f32 0.0, %v1300
  %1302 = vdwg.mxu0
  %1304 = vrot.lane.b32.xlu0 %v1301, 64
  %v1305 = vpop.permute.xlu0 %1304
  %v1307 = vadd.f32 %v481, %v1305
  %v1308 = vxor.u32 %v1307, 2147483648
  %v1309 = vmul.f32 %v1308, 1.442695
  %v1310 = vpow.pop %v1309
  %v1311 = vadd.f32 %v1310, 1.0
  %v1312 = vrcp.pop %v1311
  %v1313 = vmul.f32 %v1311, %v1312
  %v1314 = vsub.f32 1.0, %v1313
  %v1315 = vmul.f32 %v1312, %v1314
  %v1316 = vadd.f32 %v1312, %v1315
  %vm1317 = vweird.f32 %v1311
  %vm1318 = vweird.f32 %v1312
  %vm1319 = vmor %vm1317, %vm1318
  %v1320 = vsel %vm1319, %v1312, %v1316
  %v1321 = vand.u32 2147483647, %v1311
  %vm1322 = vcmp.eq.f32.partialorder %v1321, 8.507059e+37
  %v1323 = vand.u32 %v1311, 2147483648
  %v1324 = vor.u32 1.1754944e-38, %v1323
  %v1325 = vsel %vm1322, %v1324, %v1320
  %v1326 = vmul.f32 1.0, %v1325
  %v1327 = vtanh.pop %v1307
  %v1328 = vmul.f32 %v1326, %v1271
  %1330 = vrot.lane.b32.xlu0 %v1327, 80
  %v1331 = vpop.permute.xlu0 %1330
  %v1333 = vmul.f32 %v1326, %v1331
  %1335 = vrot.lane.b32.xlu0 %v1333, 16
  %v1336 = vpop.permute.xlu0 %1335
  %v1338 = vadd.f32 %v1328, %v1336
  %v1339 = vtanh.pop %v1338
  %1341 = vrot.lane.b32.xlu0 %v1339, 16
  %v1342 = vpop.permute.xlu0 %1341
  %v1344 = vmul.f32 %v1326, %v1342
  %1346 = vrot.lane.b32.xlu0 %v1344, 32
  %v1347 = vpop.permute.xlu0 %1346
  %v1348 = vsel %vm532, %v1347, 0
  %1350 = vmatpush.msra.mxu0 0.0
  %1351 = vmatpush.msra.mxu0 0.0
  %1352 = vmatpush.msra.mxu0 0.0
  %1353 = vmatpush.msra.mxu0 0.0
  %1354 = vmatpush.msra.mxu0 0.0
  %1355 = vmatpush.msra.mxu0 0.0
  %1356 = vmatpush.msra.mxu0 0.0
  %1357 = vmatpush.msra.mxu0 0.0
  %1358 = vmatpush.msra.mxu0 0.0
  %1359 = vmatpush.msra.mxu0 0.0
  %1360 = vmatpush.msra.mxu0 0.0
  %1361 = vmatpush.msra.mxu0 0.0
  %1362 = vmatpush.msra.mxu0 0.0
  %1363 = vmatpush.msra.mxu0 0.0
  %1364 = vmatpush.msra.mxu0 %v41
  %1365 = vmatpush.msra.mxu0 %v40
  %1366 = vmatmul.f32.gmra.mxu0 %v1348
  %v1367 = vpop.f32.mrf.mxu0
  %v1368 = vadd.f32 0.0, %v1367
  %1369 = vdwg.mxu0
  %1371 = vrot.lane.b32.xlu0 %v1368, 64
  %v1372 = vpop.permute.xlu0 %1371
  %v1374 = vadd.f32 %v478, %v1372
  %v1375 = vxor.u32 %v1374, 2147483648
  %v1376 = vmul.f32 %v1375, 1.442695
  %v1377 = vpow.pop %v1376
  %v1378 = vadd.f32 %v1377, 1.0
  %v1379 = vrcp.pop %v1378
  %v1380 = vmul.f32 %v1378, %v1379
  %v1381 = vsub.f32 1.0, %v1380
  %v1382 = vmul.f32 %v1379, %v1381
  %v1383 = vadd.f32 %v1379, %v1382
  %vm1384 = vweird.f32 %v1378
  %vm1385 = vweird.f32 %v1379
  %vm1386 = vmor %vm1384, %vm1385
  %v1387 = vsel %vm1386, %v1379, %v1383
  %v1388 = vand.u32 2147483647, %v1378
  %vm1389 = vcmp.eq.f32.partialorder %v1388, 8.507059e+37
  %v1390 = vand.u32 %v1378, 2147483648
  %v1391 = vor.u32 1.1754944e-38, %v1390
  %v1392 = vsel %vm1389, %v1391, %v1387
  %v1393 = vmul.f32 1.0, %v1392
  %v1394 = vtanh.pop %v1374
  %v1395 = vmul.f32 %v1393, %v1338
  %1397 = vrot.lane.b32.xlu0 %v1394, 80
  %v1398 = vpop.permute.xlu0 %1397
  %v1400 = vmul.f32 %v1393, %v1398
  %1402 = vrot.lane.b32.xlu0 %v1400, 16
  %v1403 = vpop.permute.xlu0 %1402
  %v1405 = vadd.f32 %v1395, %v1403
  %v1406 = vtanh.pop %v1405
  %1408 = vrot.lane.b32.xlu0 %v1406, 16
  %v1409 = vpop.permute.xlu0 %1408
  %v1411 = vmul.f32 %v1393, %v1409
  %1413 = vrot.lane.b32.xlu0 %v1411, 32
  %v1414 = vpop.permute.xlu0 %1413
  %v1415 = vsel %vm532, %v1414, 0
  %1417 = vmatpush.msra.mxu0 0.0
  %1418 = vmatpush.msra.mxu0 0.0
  %1419 = vmatpush.msra.mxu0 0.0
  %1420 = vmatpush.msra.mxu0 0.0
  %1421 = vmatpush.msra.mxu0 0.0
  %1422 = vmatpush.msra.mxu0 0.0
  %1423 = vmatpush.msra.mxu0 0.0
  %1424 = vmatpush.msra.mxu0 0.0
  %1425 = vmatpush.msra.mxu0 0.0
  %1426 = vmatpush.msra.mxu0 0.0
  %1427 = vmatpush.msra.mxu0 0.0
  %1428 = vmatpush.msra.mxu0 0.0
  %1429 = vmatpush.msra.mxu0 0.0
  %1430 = vmatpush.msra.mxu0 0.0
  %1431 = vmatpush.msra.mxu0 %v41
  %1432 = vmatpush.msra.mxu0 %v40
  %1433 = vmatmul.f32.gmra.mxu0 %v1415
  %v1434 = vpop.f32.mrf.mxu0
  %v1435 = vadd.f32 0.0, %v1434
  %1436 = vdwg.mxu0
  %1438 = vrot.lane.b32.xlu0 %v1435, 64
  %v1439 = vpop.permute.xlu0 %1438
  %v1441 = vadd.f32 %v475, %v1439
  %v1442 = vxor.u32 %v1441, 2147483648
  %v1443 = vmul.f32 %v1442, 1.442695
  %v1444 = vpow.pop %v1443
  %v1445 = vadd.f32 %v1444, 1.0
  %v1446 = vrcp.pop %v1445
  %v1447 = vmul.f32 %v1445, %v1446
  %v1448 = vsub.f32 1.0, %v1447
  %v1449 = vmul.f32 %v1446, %v1448
  %v1450 = vadd.f32 %v1446, %v1449
  %vm1451 = vweird.f32 %v1445
  %vm1452 = vweird.f32 %v1446
  %vm1453 = vmor %vm1451, %vm1452
  %v1454 = vsel %vm1453, %v1446, %v1450
  %v1455 = vand.u32 2147483647, %v1445
  %vm1456 = vcmp.eq.f32.partialorder %v1455, 8.507059e+37
  %v1457 = vand.u32 %v1445, 2147483648
  %v1458 = vor.u32 1.1754944e-38, %v1457
  %v1459 = vsel %vm1456, %v1458, %v1454
  %v1460 = vmul.f32 1.0, %v1459
  %v1461 = vtanh.pop %v1441
  %v1462 = vmul.f32 %v1460, %v1405
  %1464 = vrot.lane.b32.xlu0 %v1461, 80
  %v1465 = vpop.permute.xlu0 %1464
  %v1467 = vmul.f32 %v1460, %v1465
  %1469 = vrot.lane.b32.xlu0 %v1467, 16
  %v1470 = vpop.permute.xlu0 %1469
  %v1472 = vadd.f32 %v1462, %v1470
  %v1473 = vtanh.pop %v1472
  %1475 = vrot.lane.b32.xlu0 %v1473, 16
  %v1476 = vpop.permute.xlu0 %1475
  %v1478 = vmul.f32 %v1460, %v1476
  %1480 = vrot.lane.b32.xlu0 %v1478, 32
  %v1481 = vpop.permute.xlu0 %1480
  %v1482 = vsel %vm532, %v1481, 0
  %1484 = vmatpush.msra.mxu0 0.0
  %1485 = vmatpush.msra.mxu0 0.0
  %1486 = vmatpush.msra.mxu0 0.0
  %1487 = vmatpush.msra.mxu0 0.0
  %1488 = vmatpush.msra.mxu0 0.0
  %1489 = vmatpush.msra.mxu0 0.0
  %1490 = vmatpush.msra.mxu0 0.0
  %1491 = vmatpush.msra.mxu0 0.0
  %1492 = vmatpush.msra.mxu0 0.0
  %1493 = vmatpush.msra.mxu0 0.0
  %1494 = vmatpush.msra.mxu0 0.0
  %1495 = vmatpush.msra.mxu0 0.0
  %1496 = vmatpush.msra.mxu0 0.0
  %1497 = vmatpush.msra.mxu0 0.0
  %1498 = vmatpush.msra.mxu0 %v37
  %1499 = vmatpush.msra.mxu0 %v36
  %1500 = vmatmul.f32.gmra.mxu0 %v1482
  %v1501 = vpop.f32.mrf.mxu0
  %v1502 = vadd.f32 0.0, %v1501
  %1503 = vmatmul.f32.gmra.mxu0 %v1415
  %v1504 = vpop.f32.mrf.mxu0
  %v1505 = vadd.f32 0.0, %v1504
  %1506 = vmatmul.f32.gmra.mxu0 %v1348
  %v1507 = vpop.f32.mrf.mxu0
  %v1508 = vadd.f32 0.0, %v1507
  %1509 = vmatmul.f32.gmra.mxu0 %v1281
  %v1510 = vpop.f32.mrf.mxu0
  %v1511 = vadd.f32 0.0, %v1510
  %1512 = vmatmul.f32.gmra.mxu0 %v1214
  %v1513 = vpop.f32.mrf.mxu0
  %v1514 = vadd.f32 0.0, %v1513
  %1515 = vmatmul.f32.gmra.mxu0 %v1147
  %v1516 = vpop.f32.mrf.mxu0
  %v1517 = vadd.f32 0.0, %v1516
  %1518 = vmatmul.f32.gmra.mxu0 %v1080
  %v1519 = vpop.f32.mrf.mxu0
  %v1520 = vadd.f32 0.0, %v1519
  %1521 = vmatmul.f32.gmra.mxu0 %v1009
  %v1522 = vpop.f32.mrf.mxu0
  %v1523 = vadd.f32 0.0, %v1522
  %1524 = vdwg.mxu0
  %1526 = vrot.lane.b32.xlu0 %v974, 96
  %v1527 = vpop.permute.xlu0 %1526
  %v1528 = vsel %vm532, %v1527, 0
  %1530 = vmatpush.msra.mxu0 0.0
  %1531 = vmatpush.msra.mxu0 0.0
  %1532 = vmatpush.msra.mxu0 0.0
  %1533 = vmatpush.msra.mxu0 0.0
  %1534 = vmatpush.msra.mxu0 0.0
  %1535 = vmatpush.msra.mxu0 0.0
  %1536 = vmatpush.msra.mxu0 0.0
  %1537 = vmatpush.msra.mxu0 0.0
  %1538 = vmatpush.msra.mxu0 0.0
  %1539 = vmatpush.msra.mxu0 0.0
  %1540 = vmatpush.msra.mxu0 0.0
  %1541 = vmatpush.msra.mxu0 0.0
  %1542 = vmatpush.msra.mxu0 0.0
  %1543 = vmatpush.msra.mxu0 0.0
  %1544 = vmatpush.msra.mxu0 %v35
  %1545 = vmatpush.msra.mxu0 %v34
  %1546 = vmatmul.f32.gmra.mxu0 %v533
  %v1547 = vpop.f32.mrf.mxu0
  %v1548 = vadd.f32 %v1502, %v1547
  %1549 = vmatmul.f32.gmra.mxu0 %v600
  %v1550 = vpop.f32.mrf.mxu0
  %v1551 = vadd.f32 %v1505, %v1550
  %1552 = vmatmul.f32.gmra.mxu0 %v663
  %v1553 = vpop.f32.mrf.mxu0
  %v1554 = vadd.f32 %v1508, %v1553
  %1555 = vmatmul.f32.gmra.mxu0 %v726
  %v1556 = vpop.f32.mrf.mxu0
  %v1557 = vadd.f32 %v1511, %v1556
  %1558 = vmatmul.f32.gmra.mxu0 %v789
  %v1559 = vpop.f32.mrf.mxu0
  %v1560 = vadd.f32 %v1514, %v1559
  %1561 = vmatmul.f32.gmra.mxu0 %v852
  %v1562 = vpop.f32.mrf.mxu0
  %v1563 = vadd.f32 %v1517, %v1562
  %1564 = vmatmul.f32.gmra.mxu0 %v915
  %v1565 = vpop.f32.mrf.mxu0
  %v1566 = vadd.f32 %v1520, %v1565
  %1567 = vmatmul.f32.gmra.mxu0 %v1528
  %v1568 = vpop.f32.mrf.mxu0
  %v1569 = vadd.f32 %v1523, %v1568
  %1570 = vdwg.mxu0
  %v1571 = vperm.slane %v69, 0
  %v1572 = vadd.f32 %v1548, %v1571
  %v1573 = vadd.f32 %v1551, %v1571
  %v1574 = vadd.f32 %v1554, %v1571
  %v1575 = vadd.f32 %v1557, %v1571
  %v1576 = vadd.f32 %v1560, %v1571
  %v1577 = vadd.f32 %v1563, %v1571
  %v1578 = vadd.f32 %v1566, %v1571
  %v1579 = vadd.f32 %v1569, %v1571
  %v1580 = vxor.u32 %v1572, 2147483648
  %v1581 = vmul.f32 %v1580, 1.442695
  %v1582 = vpow.pop %v1581
  %v1583 = vadd.f32 %v1582, 1.0
  %v1584 = vrcp.pop %v1583
  %v1585 = vmul.f32 %v1583, %v1584
  %v1586 = vsub.f32 1.0, %v1585
  %v1587 = vmul.f32 %v1584, %v1586
  %v1588 = vadd.f32 %v1584, %v1587
  %vm1589 = vweird.f32 %v1583
  %vm1590 = vweird.f32 %v1584
  %vm1591 = vmor %vm1589, %vm1590
  %v1592 = vsel %vm1591, %v1584, %v1588
  %v1593 = vand.u32 2147483647, %v1583
  %vm1594 = vcmp.eq.f32.partialorder %v1593, 8.507059e+37
  %v1595 = vand.u32 %v1583, 2147483648
  %v1596 = vor.u32 1.1754944e-38, %v1595
  %v1597 = vsel %vm1594, %v1596, %v1592
  %v1598 = vmul.f32 1.0, %v1597
  %v1599 = vtanh.pop %v1572
  %1601 = vrot.lane.b32.xlu0 %v1599, 80
  %v1602 = vpop.permute.xlu0 %1601
  %v1604 = vmul.f32 %v1598, %v1602
  %v1605 = vtanh.pop %v1604
  %1607 = vrot.lane.b32.xlu0 %v1605, 32
  %v1608 = vpop.permute.xlu0 %1607
  %v1610 = vmul.f32 %v1598, %v1608
  %1612 = vrot.lane.b32.xlu0 %v1610, 96
  %v1613 = vpop.permute.xlu0 %1612
  %v1614 = vsel %vm532, %v1613, 0
  %1616 = vmatpush.msra.mxu0 0.0
  %1617 = vmatpush.msra.mxu0 0.0
  %1618 = vmatpush.msra.mxu0 0.0
  %1619 = vmatpush.msra.mxu0 0.0
  %1620 = vmatpush.msra.mxu0 0.0
  %1621 = vmatpush.msra.mxu0 0.0
  %1622 = vmatpush.msra.mxu0 0.0
  %1623 = vmatpush.msra.mxu0 0.0
  %1624 = vmatpush.msra.mxu0 0.0
  %1625 = vmatpush.msra.mxu0 0.0
  %1626 = vmatpush.msra.mxu0 0.0
  %1627 = vmatpush.msra.mxu0 0.0
  %1628 = vmatpush.msra.mxu0 0.0
  %1629 = vmatpush.msra.mxu0 0.0
  %1630 = vmatpush.msra.mxu0 %v43
  %1631 = vmatpush.msra.mxu0 %v42
  %1632 = vmatmul.f32.gmra.mxu0 %v1614
  %v1633 = vpop.f32.mrf.mxu0
  %v1634 = vadd.f32 0.0, %v1633
  %1635 = vdwg.mxu0
  %v1636 = vadd.f32 %v1573, %v1634
  %v1637 = vxor.u32 %v1636, 2147483648
  %v1638 = vmul.f32 %v1637, 1.442695
  %v1639 = vpow.pop %v1638
  %v1640 = vadd.f32 %v1639, 1.0
  %v1641 = vrcp.pop %v1640
  %v1642 = vmul.f32 %v1640, %v1641
  %v1643 = vsub.f32 1.0, %v1642
  %v1644 = vmul.f32 %v1641, %v1643
  %v1645 = vadd.f32 %v1641, %v1644
  %vm1646 = vweird.f32 %v1640
  %vm1647 = vweird.f32 %v1641
  %vm1648 = vmor %vm1646, %vm1647
  %v1649 = vsel %vm1648, %v1641, %v1645
  %v1650 = vand.u32 2147483647, %v1640
  %vm1651 = vcmp.eq.f32.partialorder %v1650, 8.507059e+37
  %v1652 = vand.u32 %v1640, 2147483648
  %v1653 = vor.u32 1.1754944e-38, %v1652
  %v1654 = vsel %vm1651, %v1653, %v1649
  %v1655 = vmul.f32 1.0, %v1654
  %v1656 = vtanh.pop %v1636
  %1658 = vrot.lane.b32.xlu0 %v1604, 16
  %v1659 = vpop.permute.xlu0 %1658
  %v1661 = vmul.f32 %v1655, %v1659
  %1663 = vrot.lane.b32.xlu0 %v1656, 80
  %v1664 = vpop.permute.xlu0 %1663
  %v1666 = vmul.f32 %v1655, %v1664
  %1668 = vrot.lane.b32.xlu0 %v1666, 16
  %v1669 = vpop.permute.xlu0 %1668
  %v1671 = vadd.f32 %v1661, %v1669
  %v1672 = vtanh.pop %v1671
  %1674 = vrot.lane.b32.xlu0 %v1672, 16
  %v1675 = vpop.permute.xlu0 %1674
  %v1677 = vmul.f32 %v1655, %v1675
  %1679 = vrot.lane.b32.xlu0 %v1677, 96
  %v1680 = vpop.permute.xlu0 %1679
  %v1681 = vsel %vm532, %v1680, 0
  %1683 = vmatpush.msra.mxu0 0.0
  %1684 = vmatpush.msra.mxu0 0.0
  %1685 = vmatpush.msra.mxu0 0.0
  %1686 = vmatpush.msra.mxu0 0.0
  %1687 = vmatpush.msra.mxu0 0.0
  %1688 = vmatpush.msra.mxu0 0.0
  %1689 = vmatpush.msra.mxu0 0.0
  %1690 = vmatpush.msra.mxu0 0.0
  %1691 = vmatpush.msra.mxu0 0.0
  %1692 = vmatpush.msra.mxu0 0.0
  %1693 = vmatpush.msra.mxu0 0.0
  %1694 = vmatpush.msra.mxu0 0.0
  %1695 = vmatpush.msra.mxu0 0.0
  %1696 = vmatpush.msra.mxu0 0.0
  %1697 = vmatpush.msra.mxu0 %v43
  %1698 = vmatpush.msra.mxu0 %v42
  %1699 = vmatmul.f32.gmra.mxu0 %v1681
  %v1700 = vpop.f32.mrf.mxu0
  %v1701 = vadd.f32 0.0, %v1700
  %1702 = vdwg.mxu0
  %v1703 = vadd.f32 %v1574, %v1701
  %v1704 = vxor.u32 %v1703, 2147483648
  %v1705 = vmul.f32 %v1704, 1.442695
  %v1706 = vpow.pop %v1705
  %v1707 = vadd.f32 %v1706, 1.0
  %v1708 = vrcp.pop %v1707
  %v1709 = vmul.f32 %v1707, %v1708
  %v1710 = vsub.f32 1.0, %v1709
  %v1711 = vmul.f32 %v1708, %v1710
  %v1712 = vadd.f32 %v1708, %v1711
  %vm1713 = vweird.f32 %v1707
  %vm1714 = vweird.f32 %v1708
  %vm1715 = vmor %vm1713, %vm1714
  %v1716 = vsel %vm1715, %v1708, %v1712
  %v1717 = vand.u32 2147483647, %v1707
  %vm1718 = vcmp.eq.f32.partialorder %v1717, 8.507059e+37
  %v1719 = vand.u32 %v1707, 2147483648
  %v1720 = vor.u32 1.1754944e-38, %v1719
  %v1721 = vsel %vm1718, %v1720, %v1716
  %v1722 = vmul.f32 1.0, %v1721
  %v1723 = vtanh.pop %v1703
  %v1724 = vmul.f32 %v1722, %v1671
  %1726 = vrot.lane.b32.xlu0 %v1723, 80
  %v1727 = vpop.permute.xlu0 %1726
  %v1729 = vmul.f32 %v1722, %v1727
  %1731 = vrot.lane.b32.xlu0 %v1729, 16
  %v1732 = vpop.permute.xlu0 %1731
  %v1734 = vadd.f32 %v1724, %v1732
  %v1735 = vtanh.pop %v1734
  %1737 = vrot.lane.b32.xlu0 %v1735, 16
  %v1738 = vpop.permute.xlu0 %1737
  %v1740 = vmul.f32 %v1722, %v1738
  %1742 = vrot.lane.b32.xlu0 %v1740, 96
  %v1743 = vpop.permute.xlu0 %1742
  %v1744 = vsel %vm532, %v1743, 0
  %1746 = vmatpush.msra.mxu0 0.0
  %1747 = vmatpush.msra.mxu0 0.0
  %1748 = vmatpush.msra.mxu0 0.0
  %1749 = vmatpush.msra.mxu0 0.0
  %1750 = vmatpush.msra.mxu0 0.0
  %1751 = vmatpush.msra.mxu0 0.0
  %1752 = vmatpush.msra.mxu0 0.0
  %1753 = vmatpush.msra.mxu0 0.0
  %1754 = vmatpush.msra.mxu0 0.0
  %1755 = vmatpush.msra.mxu0 0.0
  %1756 = vmatpush.msra.mxu0 0.0
  %1757 = vmatpush.msra.mxu0 0.0
  %1758 = vmatpush.msra.mxu0 0.0
  %1759 = vmatpush.msra.mxu0 0.0
  %1760 = vmatpush.msra.mxu0 %v43
  %1761 = vmatpush.msra.mxu0 %v42
  %1762 = vmatmul.f32.gmra.mxu0 %v1744
  %v1763 = vpop.f32.mrf.mxu0
  %v1764 = vadd.f32 0.0, %v1763
  %1765 = vdwg.mxu0
  %v1766 = vadd.f32 %v1575, %v1764
  %v1767 = vxor.u32 %v1766, 2147483648
  %v1768 = vmul.f32 %v1767, 1.442695
  %v1769 = vpow.pop %v1768
  %v1770 = vadd.f32 %v1769, 1.0
  %v1771 = vrcp.pop %v1770
  %v1772 = vmul.f32 %v1770, %v1771
  %v1773 = vsub.f32 1.0, %v1772
  %v1774 = vmul.f32 %v1771, %v1773
  %v1775 = vadd.f32 %v1771, %v1774
  %vm1776 = vweird.f32 %v1770
  %vm1777 = vweird.f32 %v1771
  %vm1778 = vmor %vm1776, %vm1777
  %v1779 = vsel %vm1778, %v1771, %v1775
  %v1780 = vand.u32 2147483647, %v1770
  %vm1781 = vcmp.eq.f32.partialorder %v1780, 8.507059e+37
  %v1782 = vand.u32 %v1770, 2147483648
  %v1783 = vor.u32 1.1754944e-38, %v1782
  %v1784 = vsel %vm1781, %v1783, %v1779
  %v1785 = vmul.f32 1.0, %v1784
  %v1786 = vtanh.pop %v1766
  %v1787 = vmul.f32 %v1785, %v1734
  %1789 = vrot.lane.b32.xlu0 %v1786, 80
  %v1790 = vpop.permute.xlu0 %1789
  %v1792 = vmul.f32 %v1785, %v1790
  %1794 = vrot.lane.b32.xlu0 %v1792, 16
  %v1795 = vpop.permute.xlu0 %1794
  %v1797 = vadd.f32 %v1787, %v1795
  %v1798 = vtanh.pop %v1797
  %1800 = vrot.lane.b32.xlu0 %v1798, 16
  %v1801 = vpop.permute.xlu0 %1800
  %v1803 = vmul.f32 %v1785, %v1801
  %1805 = vrot.lane.b32.xlu0 %v1803, 96
  %v1806 = vpop.permute.xlu0 %1805
  %v1807 = vsel %vm532, %v1806, 0
  %1809 = vmatpush.msra.mxu0 0.0
  %1810 = vmatpush.msra.mxu0 0.0
  %1811 = vmatpush.msra.mxu0 0.0
  %1812 = vmatpush.msra.mxu0 0.0
  %1813 = vmatpush.msra.mxu0 0.0
  %1814 = vmatpush.msra.mxu0 0.0
  %1815 = vmatpush.msra.mxu0 0.0
  %1816 = vmatpush.msra.mxu0 0.0
  %1817 = vmatpush.msra.mxu0 0.0
  %1818 = vmatpush.msra.mxu0 0.0
  %1819 = vmatpush.msra.mxu0 0.0
  %1820 = vmatpush.msra.mxu0 0.0
  %1821 = vmatpush.msra.mxu0 0.0
  %1822 = vmatpush.msra.mxu0 0.0
  %1823 = vmatpush.msra.mxu0 %v43
  %1824 = vmatpush.msra.mxu0 %v42
  %1825 = vmatmul.f32.gmra.mxu0 %v1807
  %v1826 = vpop.f32.mrf.mxu0
  %v1827 = vadd.f32 0.0, %v1826
  %1828 = vdwg.mxu0
  %v1829 = vadd.f32 %v1576, %v1827
  %v1830 = vxor.u32 %v1829, 2147483648
  %v1831 = vmul.f32 %v1830, 1.442695
  %v1832 = vpow.pop %v1831
  %v1833 = vadd.f32 %v1832, 1.0
  %v1834 = vrcp.pop %v1833
  %v1835 = vmul.f32 %v1833, %v1834
  %v1836 = vsub.f32 1.0, %v1835
  %v1837 = vmul.f32 %v1834, %v1836
  %v1838 = vadd.f32 %v1834, %v1837
  %vm1839 = vweird.f32 %v1833
  %vm1840 = vweird.f32 %v1834
  %vm1841 = vmor %vm1839, %vm1840
  %v1842 = vsel %vm1841, %v1834, %v1838
  %v1843 = vand.u32 2147483647, %v1833
  %vm1844 = vcmp.eq.f32.partialorder %v1843, 8.507059e+37
  %v1845 = vand.u32 %v1833, 2147483648
  %v1846 = vor.u32 1.1754944e-38, %v1845
  %v1847 = vsel %vm1844, %v1846, %v1842
  %v1848 = vmul.f32 1.0, %v1847
  %v1849 = vtanh.pop %v1829
  %v1850 = vmul.f32 %v1848, %v1797
  %1852 = vrot.lane.b32.xlu0 %v1849, 80
  %v1853 = vpop.permute.xlu0 %1852
  %v1855 = vmul.f32 %v1848, %v1853
  %1857 = vrot.lane.b32.xlu0 %v1855, 16
  %v1858 = vpop.permute.xlu0 %1857
  %v1860 = vadd.f32 %v1850, %v1858
  %v1861 = vtanh.pop %v1860
  %1863 = vrot.lane.b32.xlu0 %v1861, 16
  %v1864 = vpop.permute.xlu0 %1863
  %v1866 = vmul.f32 %v1848, %v1864
  %1868 = vrot.lane.b32.xlu0 %v1866, 96
  %v1869 = vpop.permute.xlu0 %1868
  %v1870 = vsel %vm532, %v1869, 0
  %1872 = vmatpush.msra.mxu0 0.0
  %1873 = vmatpush.msra.mxu0 0.0
  %1874 = vmatpush.msra.mxu0 0.0
  %1875 = vmatpush.msra.mxu0 0.0
  %1876 = vmatpush.msra.mxu0 0.0
  %1877 = vmatpush.msra.mxu0 0.0
  %1878 = vmatpush.msra.mxu0 0.0
  %1879 = vmatpush.msra.mxu0 0.0
  %1880 = vmatpush.msra.mxu0 0.0
  %1881 = vmatpush.msra.mxu0 0.0
  %1882 = vmatpush.msra.mxu0 0.0
  %1883 = vmatpush.msra.mxu0 0.0
  %1884 = vmatpush.msra.mxu0 0.0
  %1885 = vmatpush.msra.mxu0 0.0
  %1886 = vmatpush.msra.mxu0 %v43
  %1887 = vmatpush.msra.mxu0 %v42
  %1888 = vmatmul.f32.gmra.mxu0 %v1870
  %v1889 = vpop.f32.mrf.mxu0
  %v1890 = vadd.f32 0.0, %v1889
  %1891 = vdwg.mxu0
  %v1892 = vadd.f32 %v1577, %v1890
  %v1893 = vxor.u32 %v1892, 2147483648
  %v1894 = vmul.f32 %v1893, 1.442695
  %v1895 = vpow.pop %v1894
  %v1896 = vadd.f32 %v1895, 1.0
  %v1897 = vrcp.pop %v1896
  %v1898 = vmul.f32 %v1896, %v1897
  %v1899 = vsub.f32 1.0, %v1898
  %v1900 = vmul.f32 %v1897, %v1899
  %v1901 = vadd.f32 %v1897, %v1900
  %vm1902 = vweird.f32 %v1896
  %vm1903 = vweird.f32 %v1897
  %vm1904 = vmor %vm1902, %vm1903
  %v1905 = vsel %vm1904, %v1897, %v1901
  %v1906 = vand.u32 2147483647, %v1896
  %vm1907 = vcmp.eq.f32.partialorder %v1906, 8.507059e+37
  %v1908 = vand.u32 %v1896, 2147483648
  %v1909 = vor.u32 1.1754944e-38, %v1908
  %v1910 = vsel %vm1907, %v1909, %v1905
  %v1911 = vmul.f32 1.0, %v1910
  %v1912 = vtanh.pop %v1892
  %v1913 = vmul.f32 %v1911, %v1860
  %1915 = vrot.lane.b32.xlu0 %v1912, 80
  %v1916 = vpop.permute.xlu0 %1915
  %v1918 = vmul.f32 %v1911, %v1916
  %1920 = vrot.lane.b32.xlu0 %v1918, 16
  %v1921 = vpop.permute.xlu0 %1920
  %v1923 = vadd.f32 %v1913, %v1921
  %v1924 = vtanh.pop %v1923
  %1926 = vrot.lane.b32.xlu0 %v1924, 16
  %v1927 = vpop.permute.xlu0 %1926
  %v1929 = vmul.f32 %v1911, %v1927
  %1931 = vrot.lane.b32.xlu0 %v1929, 96
  %v1932 = vpop.permute.xlu0 %1931
  %v1933 = vsel %vm532, %v1932, 0
  %1935 = vmatpush.msra.mxu0 0.0
  %1936 = vmatpush.msra.mxu0 0.0
  %1937 = vmatpush.msra.mxu0 0.0
  %1938 = vmatpush.msra.mxu0 0.0
  %1939 = vmatpush.msra.mxu0 0.0
  %1940 = vmatpush.msra.mxu0 0.0
  %1941 = vmatpush.msra.mxu0 0.0
  %1942 = vmatpush.msra.mxu0 0.0
  %1943 = vmatpush.msra.mxu0 0.0
  %1944 = vmatpush.msra.mxu0 0.0
  %1945 = vmatpush.msra.mxu0 0.0
  %1946 = vmatpush.msra.mxu0 0.0
  %1947 = vmatpush.msra.mxu0 0.0
  %1948 = vmatpush.msra.mxu0 0.0
  %1949 = vmatpush.msra.mxu0 %v43
  %1950 = vmatpush.msra.mxu0 %v42
  %1951 = vmatmul.f32.gmra.mxu0 %v1933
  %v1952 = vpop.f32.mrf.mxu0
  %v1953 = vadd.f32 0.0, %v1952
  %1954 = vdwg.mxu0
  %v1955 = vadd.f32 %v1578, %v1953
  %v1956 = vxor.u32 %v1955, 2147483648
  %v1957 = vmul.f32 %v1956, 1.442695
  %v1958 = vpow.pop %v1957
  %v1959 = vadd.f32 %v1958, 1.0
  %v1960 = vrcp.pop %v1959
  %v1961 = vmul.f32 %v1959, %v1960
  %v1962 = vsub.f32 1.0, %v1961
  %v1963 = vmul.f32 %v1960, %v1962
  %v1964 = vadd.f32 %v1960, %v1963
  %vm1965 = vweird.f32 %v1959
  %vm1966 = vweird.f32 %v1960
  %vm1967 = vmor %vm1965, %vm1966
  %v1968 = vsel %vm1967, %v1960, %v1964
  %v1969 = vand.u32 2147483647, %v1959
  %vm1970 = vcmp.eq.f32.partialorder %v1969, 8.507059e+37
  %v1971 = vand.u32 %v1959, 2147483648
  %v1972 = vor.u32 1.1754944e-38, %v1971
  %v1973 = vsel %vm1970, %v1972, %v1968
  %v1974 = vmul.f32 1.0, %v1973
  %v1975 = vtanh.pop %v1955
  %v1976 = vmul.f32 %v1974, %v1923
  %1978 = vrot.lane.b32.xlu0 %v1975, 80
  %v1979 = vpop.permute.xlu0 %1978
  %v1981 = vmul.f32 %v1974, %v1979
  %1983 = vrot.lane.b32.xlu0 %v1981, 16
  %v1984 = vpop.permute.xlu0 %1983
  %v1986 = vadd.f32 %v1976, %v1984
  %v1987 = vtanh.pop %v1986
  %1989 = vrot.lane.b32.xlu0 %v1987, 16
  %v1990 = vpop.permute.xlu0 %1989
  %v1992 = vmul.f32 %v1974, %v1990
  %1994 = vrot.lane.b32.xlu0 %v1992, 96
  %v1995 = vpop.permute.xlu0 %1994
  %v1996 = vsel %vm532, %v1995, 0
  %1998 = vmatpush.msra.mxu0 0.0
  %1999 = vmatpush.msra.mxu0 0.0
  %2000 = vmatpush.msra.mxu0 0.0
  %2001 = vmatpush.msra.mxu0 0.0
  %2002 = vmatpush.msra.mxu0 0.0
  %2003 = vmatpush.msra.mxu0 0.0
  %2004 = vmatpush.msra.mxu0 0.0
  %2005 = vmatpush.msra.mxu0 0.0
  %2006 = vmatpush.msra.mxu0 0.0
  %2007 = vmatpush.msra.mxu0 0.0
  %2008 = vmatpush.msra.mxu0 0.0
  %2009 = vmatpush.msra.mxu0 0.0
  %2010 = vmatpush.msra.mxu0 0.0
  %2011 = vmatpush.msra.mxu0 0.0
  %2012 = vmatpush.msra.mxu0 %v43
  %2013 = vmatpush.msra.mxu0 %v42
  %2014 = vmatmul.f32.gmra.mxu0 %v1996
  %v2015 = vpop.f32.mrf.mxu0
  %v2016 = vadd.f32 0.0, %v2015
  %2017 = vdwg.mxu0
  %v2018 = vadd.f32 %v1579, %v2016
  %v2019 = vxor.u32 %v2018, 2147483648
  %v2020 = vmul.f32 %v2019, 1.442695
  %v2021 = vpow.pop %v2020
  %v2022 = vadd.f32 %v2021, 1.0
  %v2023 = vrcp.pop %v2022
  %v2024 = vmul.f32 %v2022, %v2023
  %v2025 = vsub.f32 1.0, %v2024
  %v2026 = vmul.f32 %v2023, %v2025
  %v2027 = vadd.f32 %v2023, %v2026
  %vm2028 = vweird.f32 %v2022
  %vm2029 = vweird.f32 %v2023
  %vm2030 = vmor %vm2028, %vm2029
  %v2031 = vsel %vm2030, %v2023, %v2027
  %v2032 = vand.u32 2147483647, %v2022
  %vm2033 = vcmp.eq.f32.partialorder %v2032, 8.507059e+37
  %v2034 = vand.u32 %v2022, 2147483648
  %v2035 = vor.u32 1.1754944e-38, %v2034
  %v2036 = vsel %vm2033, %v2035, %v2031
  %v2037 = vmul.f32 1.0, %v2036
  %v2038 = vtanh.pop %v2018
  %v2039 = vmul.f32 %v2037, %v1986
  %2041 = vrot.lane.b32.xlu0 %v2038, 80
  %v2042 = vpop.permute.xlu0 %2041
  %v2044 = vmul.f32 %v2037, %v2042
  %2046 = vrot.lane.b32.xlu0 %v2044, 16
  %v2047 = vpop.permute.xlu0 %2046
  %v2049 = vadd.f32 %v2039, %v2047
  %v2050 = vtanh.pop %v2049
  %2052 = vrot.lane.b32.xlu0 %v2050, 16
  %v2053 = vpop.permute.xlu0 %2052
  %v2055 = vmul.f32 %v2037, %v2053
  %v2056 = vxor.u32 %v1579, 2147483648
  %v2057 = vmul.f32 %v2056, 1.442695
  %v2058 = vpow.pop %v2057
  %v2059 = vadd.f32 %v2058, 1.0
  %v2060 = vrcp.pop %v2059
  %v2061 = vmul.f32 %v2059, %v2060
  %v2062 = vsub.f32 1.0, %v2061
  %v2063 = vmul.f32 %v2060, %v2062
  %v2064 = vadd.f32 %v2060, %v2063
  %vm2065 = vweird.f32 %v2059
  %vm2066 = vweird.f32 %v2060
  %vm2067 = vmor %vm2065, %vm2066
  %v2068 = vsel %vm2067, %v2060, %v2064
  %v2069 = vand.u32 2147483647, %v2059
  %vm2070 = vcmp.eq.f32.partialorder %v2069, 8.507059e+37
  %v2071 = vand.u32 %v2059, 2147483648
  %v2072 = vor.u32 1.1754944e-38, %v2071
  %v2073 = vsel %vm2070, %v2072, %v2068
  %v2074 = vmul.f32 1.0, %v2073
  %v2075 = vtanh.pop %v1579
  %2077 = vrot.lane.b32.xlu0 %v2075, 80
  %v2078 = vpop.permute.xlu0 %2077
  %v2080 = vmul.f32 %v2074, %v2078
  %v2081 = vtanh.pop %v2080
  %2083 = vrot.lane.b32.xlu0 %v2081, 32
  %v2084 = vpop.permute.xlu0 %2083
  %v2086 = vmul.f32 %v2074, %v2084
  %2088 = vrot.lane.b32.xlu0 %v2055, 96
  %v2089 = vpop.permute.xlu0 %2088
  %v2090 = vsel %vm532, %v2089, 0
  %2092 = vmatpush.msra.mxu0 0.0
  %2093 = vmatpush.msra.mxu0 0.0
  %2094 = vmatpush.msra.mxu0 0.0
  %2095 = vmatpush.msra.mxu0 0.0
  %2096 = vmatpush.msra.mxu0 0.0
  %2097 = vmatpush.msra.mxu0 0.0
  %2098 = vmatpush.msra.mxu0 0.0
  %2099 = vmatpush.msra.mxu0 0.0
  %2100 = vmatpush.msra.mxu0 0.0
  %2101 = vmatpush.msra.mxu0 0.0
  %2102 = vmatpush.msra.mxu0 0.0
  %2103 = vmatpush.msra.mxu0 0.0
  %2104 = vmatpush.msra.mxu0 0.0
  %2105 = vmatpush.msra.mxu0 0.0
  %2106 = vmatpush.msra.mxu0 %v45
  %2107 = vmatpush.msra.mxu0 %v44
  %2108 = vmatmul.f32.gmra.mxu0 %v2090
  %v2109 = vpop.f32.mrf.mxu0
  %v2110 = vadd.f32 0.0, %v2109
  %2111 = vdwg.mxu0
  %v2112 = vadd.f32 %v430, %v2110
  %2114 = vrot.lane.b32.xlu0 %v2086, 32
  %v2115 = vpop.permute.xlu0 %2114
  %v2116 = vsel %vm532, %v2115, 0
  %2118 = vmatpush.msra.mxu0 0.0
  %2119 = vmatpush.msra.mxu0 0.0
  %2120 = vmatpush.msra.mxu0 0.0
  %2121 = vmatpush.msra.mxu0 0.0
  %2122 = vmatpush.msra.mxu0 0.0
  %2123 = vmatpush.msra.mxu0 0.0
  %2124 = vmatpush.msra.mxu0 0.0
  %2125 = vmatpush.msra.mxu0 0.0
  %2126 = vmatpush.msra.mxu0 0.0
  %2127 = vmatpush.msra.mxu0 0.0
  %2128 = vmatpush.msra.mxu0 0.0
  %2129 = vmatpush.msra.mxu0 0.0
  %2130 = vmatpush.msra.mxu0 0.0
  %2131 = vmatpush.msra.mxu0 0.0
  %2132 = vmatpush.msra.mxu0 %v47
  %2133 = vmatpush.msra.mxu0 %v46
  %2134 = vmatmul.f32.gmra.mxu0 %v2116
  %v2135 = vpop.f32.mrf.mxu0
  %v2136 = vadd.f32 0.0, %v2135
  %2137 = vdwg.mxu0
  %v2138 = vadd.f32 %v2112, %v2136
  %vm2139 = vcmp.gt.f32.partialorder %v2138, 0.0
  %v2140 = vmul.f32 %v2138, 0.01
  %v2141 = vsel %vm2139, %v2138, %v2140
  %v2142 = vperm.slane %v71, 0
  %vm2143 = vcmask 523264
  %v2145 = vsel %vm2143, %v2141, 0
  %2147 = vmatpush.msra.mxu0 0.0
  %2148 = vmatpush.msra.mxu0 0.0
  %2149 = vmatpush.msra.mxu0 0.0
  %2150 = vmatpush.msra.mxu0 0.0
  %2151 = vmatpush.msra.mxu0 0.0
  %2152 = vmatpush.msra.mxu0 0.0
  %2153 = vmatpush.msra.mxu0 0.0
  %2154 = vmatpush.msra.mxu0 0.0
  %2155 = vmatpush.msra.mxu0 %v67
  %2156 = vmatpush.msra.mxu0 %v66
  %2157 = vmatpush.msra.mxu0 %v65
  %2158 = vmatpush.msra.mxu0 %v64
  %2159 = vmatpush.msra.mxu0 %v63
  %2160 = vmatpush.msra.mxu0 %v62
  %2161 = vmatpush.msra.mxu0 %v61
  %2162 = vmatpush.msra.mxu0 %v60
  %2163 = vmatmul.f32.gmra.mxu0 %v2145
  %v2164 = vpop.f32.mrf.mxu0
  %v2165 = vadd.f32 %v2142, %v2164
  %2166 = vdwg.mxu0
  %2167 = vst [vmem:[%s3] sm:$0xff] %v2165
  // Predicated region
  $region14: #{sgke_sg_e_forward.1} parent=0 // pred_check
    _
  $region15: #{sgke_sg_e_forward.1} parent=0 // pred_check_branch
    %2169 = sbr.rel (0) target = $region17
  $region16: #{sgke_sg_e_forward.1} parent=0 // pred_region
    _
  $region17: #{sgke_sg_e_forward.1} parent=0 // pred_fallthru
    _
  // Predicated region
  $region18: #{sgke_sg_e_forward.1} parent=0 // pred_check
    _
  $region19: #{sgke_sg_e_forward.1} parent=0 // pred_check_branch
    %2171 = sbr.rel (0) target = $region21
  $region20: #{sgke_sg_e_forward.1} parent=0 // pred_region
    _
  $region21: #{sgke_sg_e_forward.1} parent=0 // pred_fallthru
    _

</llo_original>
